<compile_context>
chip_gen: v7x
topology: tpu7x:2x2x1
jax: 0.10.0
libtpu: 0.0.40
codegen_flags: <defaults>
</compile_context>

<pallas_src>
import jax
import jax.numpy as jnp
from jax.experimental import pallas as pl
from jax.experimental.pallas import tpu as pltpu

INPUT_DIM = 3
HIDDEN_DIM = 10
TARGET_SIZE = 1
BN_EPS = 1e-5


def mlp_kernel(w1_ref, b1_ref, w2_ref, b2_ref, w3_ref, b3_ref, x_ref, o_ref):
    """x_ref: [3, TILE_N] (batch on lanes). o_ref: [1, TILE_N].

    Weights live in SMEM; each Linear is unrolled into scalar-broadcast VPU
    FMAs (30 + 100 + 10 MACs per lane column), no MXU.
    """
    # Pull the 3 input feature rows once (cheap sublane extracts).
    x_rows = [x_ref[k, :] for k in range(INPUT_DIM)]          # 3 x [TILE_N]

    # ---- Linear(3,10) [BN already folded into w1/b1] + ReLU ----
    h1 = []
    for j in range(HIDDEN_DIM):
        acc = x_rows[0] * w1_ref[0, j] + b1_ref[j]
        for k in range(1, INPUT_DIM):
            acc = acc + x_rows[k] * w1_ref[k, j]
        h1.append(jnp.maximum(acc, 0.0))

    # ---- Linear(10,10) + ReLU ----
    h2 = []
    for j in range(HIDDEN_DIM):
        acc = h1[0] * w2_ref[0, j] + b2_ref[j]
        for k in range(1, HIDDEN_DIM):
            acc = acc + h1[k] * w2_ref[k, j]
        h2.append(jnp.maximum(acc, 0.0))

    # ---- Linear(10,1) + Sigmoid ----
    acc = h2[0] * w3_ref[0] + b3_ref[0]
    for k in range(1, HIDDEN_DIM):
        acc = acc + h2[k] * w3_ref[k]
    o_ref[0, :] = jax.nn.sigmoid(acc)


def neural_classifier_forward(x, params, *, tile_n=2048):
    """x: [N, 3] float32. Returns [N, 1] float32 (regression objective)."""
    gamma, beta, w1, b1, w2, b2, w3, b3 = params
    x = x.astype(jnp.float32)
    n = x.shape[0]

    # ---- Training-mode BatchNorm1d stats, folded into the first Linear ----
    mu = jnp.mean(x, axis=0)                                  # [3]
    var = jnp.mean((x - mu) ** 2, axis=0)                     # [3], biased (matches torch)
    inv_std = 1.0 / jnp.sqrt(var + BN_EPS)
    scale = gamma[0] * inv_std                                # [3]
    shift = beta[0] - mu * scale                              # [3]
    w1_eff = w1 * scale[:, None]                              # [3, 10]
    b1_eff = shift @ w1 + b1[0]                               # [10]

    # ---- Batch-on-lanes layout, padded to a multiple of the lane tile ----
    n_pad = pl.cdiv(n, tile_n) * tile_n
    xT = jnp.zeros((INPUT_DIM, n_pad), jnp.float32).at[:, :n].set(x.T)

    smem = pl.BlockSpec(memory_space=pltpu.MemorySpace.SMEM)
    out = pl.pallas_call(
        mlp_kernel,
        out_shape=jax.ShapeDtypeStruct((TARGET_SIZE, n_pad), jnp.float32),
        grid=(n_pad // tile_n,),
        in_specs=[smem, smem, smem, smem, smem, smem,                 # weights resident in SMEM
                  pl.BlockSpec((INPUT_DIM, tile_n), lambda i: (0, i))],
        out_specs=pl.BlockSpec((TARGET_SIZE, tile_n), lambda i: (0, i)),
        compiler_params=pltpu.CompilerParams(
            dimension_semantics=("parallel",),
            vmem_limit_bytes=16 * 1024 * 1024),
        cost_estimate=pl.CostEstimate(
            flops=280 * n_pad,
            transcendentals=2 * n_pad,
            bytes_accessed=16 * n_pad),
    )(w1_eff, b1_eff, w2, b2[0], w3[:, 0], b3[0], xT)

    return out[:, :n].T                                       # [N, 1]


def init_params(key):
    """Deterministic init mimicking PyTorch defaults.

    BatchNorm1d: gamma=1, beta=0.
    Linear(in,out): weight/bias ~ U(-1/sqrt(in), 1/sqrt(in)); weights stored
    here as [in, out] (already transposed for x @ W, equivalent to x @ W.T + b).
    """
    ks = jax.random.split(key, 6)

    def linear(kw, kb, fan_in, fan_out):
        bound = 1.0 / jnp.sqrt(jnp.float32(fan_in))
        w = jax.random.uniform(kw, (fan_in, fan_out), jnp.float32, -bound, bound)
        b = jax.random.uniform(kb, (1, fan_out), jnp.float32, -bound, bound)
        return w, b

    gamma = jnp.ones((1, INPUT_DIM), jnp.float32)
    beta = jnp.zeros((1, INPUT_DIM), jnp.float32)
    w1, b1 = linear(ks[0], ks[1], INPUT_DIM, HIDDEN_DIM)
    w2, b2 = linear(ks[2], ks[3], HIDDEN_DIM, HIDDEN_DIM)
    w3, b3 = linear(ks[4], ks[5], HIDDEN_DIM, TARGET_SIZE)
    return gamma, beta, w1, b1, w2, b2, w3, b3


def reference_forward(x, params):
    """Pure-JAX reference matching the PyTorch forward (training-mode BN)."""
    gamma, beta, w1, b1, w2, b2, w3, b3 = params
    mu = jnp.mean(x, axis=0, keepdims=True)
    var = jnp.mean((x - mu) ** 2, axis=0, keepdims=True)
    xn = (x - mu) / jnp.sqrt(var + BN_EPS) * gamma + beta
    h1 = jnp.maximum(xn @ w1 + b1, 0.0)
    h2 = jnp.maximum(h1 @ w2 + b2, 0.0)
    return jax.nn.sigmoid(h2 @ w3 + b3)


# TODO(synk): trainer()/Adam/BCELoss training loop is not part of forward and is not implemented.

if __name__ == "__main__":
    key = jax.random.PRNGKey(0)
    k_x, k_p = jax.random.split(key)

    N = 200  # small batch; kernel pads to the lane tile internally
    x = jax.random.normal(k_x, (N, INPUT_DIM), jnp.float32)
    params = init_params(k_p)

    out = neural_classifier_forward(x, params)
    out = jax.block_until_ready(out)

    ref = reference_forward(x, params)
    assert out.shape == (N, TARGET_SIZE), out.shape
    assert jnp.allclose(out, ref, atol=3e-5, rtol=1e-4), (out, ref)

    print("KERNEL_OK")
</pallas_src>

<mosaic_0001>
module attributes {stable_mosaic.version = 11 : i64} {
  func.func @mlp_kernel(%arg0: i32, %arg1: memref<3x10xf32, #tpu.memory_space<smem>>, %arg2: memref<10xf32, #tpu.memory_space<smem>>, %arg3: memref<10x10xf32, #tpu.memory_space<smem>>, %arg4: memref<10xf32, #tpu.memory_space<smem>>, %arg5: memref<10xf32, #tpu.memory_space<smem>>, %arg6: memref<1xf32, #tpu.memory_space<smem>>, %arg7: memref<3x2048xf32, #tpu.memory_space<vmem>>, %arg8: memref<1x2048xf32, #tpu.memory_space<vmem>>) attributes {dimension_semantics = [#tpu.dimension_semantics<parallel>], iteration_bounds = array<i64: 1>, scalar_prefetch = 0 : i64, scratch_operands = 0 : i64, tpu.core_type = #tpu.core_type<tc>, window_params = [{transform_indices = @transform_0, window_bounds = array<i64: 3, 10>}, {transform_indices = @transform_1, window_bounds = array<i64: 10>}, {transform_indices = @transform_2, window_bounds = array<i64: 10, 10>}, {transform_indices = @transform_3, window_bounds = array<i64: 10>}, {transform_indices = @transform_4, window_bounds = array<i64: 10>}, {transform_indices = @transform_5, window_bounds = array<i64: 1>}, {transform_indices = @transform_6, window_bounds = array<i64: 3, 2048>}, {transform_indices = @transform_7, window_bounds = array<i64: 1, 2048>}]} {
    %c0 = arith.constant 0 : index
    %c0_0 = arith.constant 0 : index
    %0 = vector.load %arg7[%c0, %c0_0] : memref<3x2048xf32, #tpu.memory_space<vmem>>, vector<1x2048xf32>
    %1 = vector.shape_cast %0 : vector<1x2048xf32> to vector<2048xf32>
    %c1 = arith.constant 1 : index
    %c0_1 = arith.constant 0 : index
    %2 = vector.load %arg7[%c1, %c0_1] : memref<3x2048xf32, #tpu.memory_space<vmem>>, vector<1x2048xf32>
    %3 = vector.shape_cast %2 : vector<1x2048xf32> to vector<2048xf32>
    %c2 = arith.constant 2 : index
    %c0_2 = arith.constant 0 : index
    %4 = vector.load %arg7[%c2, %c0_2] : memref<3x2048xf32, #tpu.memory_space<vmem>>, vector<1x2048xf32>
    %5 = vector.shape_cast %4 : vector<1x2048xf32> to vector<2048xf32>
    %c0_3 = arith.constant 0 : index
    %c0_4 = arith.constant 0 : index
    %6 = memref.load %arg1[%c0_3, %c0_4] : memref<3x10xf32, #tpu.memory_space<smem>>
    %7 = vector.broadcast %6 : f32 to vector<2048xf32>
    %8 = arith.mulf %1, %7 : vector<2048xf32>
    %c0_5 = arith.constant 0 : index
    %9 = memref.load %arg2[%c0_5] : memref<10xf32, #tpu.memory_space<smem>>
    %10 = vector.broadcast %9 : f32 to vector<2048xf32>
    %11 = arith.addf %8, %10 : vector<2048xf32>
    %c1_6 = arith.constant 1 : index
    %c0_7 = arith.constant 0 : index
    %12 = memref.load %arg1[%c1_6, %c0_7] : memref<3x10xf32, #tpu.memory_space<smem>>
    %13 = vector.broadcast %12 : f32 to vector<2048xf32>
    %14 = arith.mulf %3, %13 : vector<2048xf32>
    %15 = arith.addf %11, %14 : vector<2048xf32>
    %c2_8 = arith.constant 2 : index
    %c0_9 = arith.constant 0 : index
    %16 = memref.load %arg1[%c2_8, %c0_9] : memref<3x10xf32, #tpu.memory_space<smem>>
    %17 = vector.broadcast %16 : f32 to vector<2048xf32>
    %18 = arith.mulf %5, %17 : vector<2048xf32>
    %19 = arith.addf %15, %18 : vector<2048xf32>
    %cst = arith.constant 0.000000e+00 : f32
    %20 = vector.broadcast %cst : f32 to vector<2048xf32>
    %21 = arith.maximumf %19, %20 : vector<2048xf32>
    %c0_10 = arith.constant 0 : index
    %c1_11 = arith.constant 1 : index
    %22 = memref.load %arg1[%c0_10, %c1_11] : memref<3x10xf32, #tpu.memory_space<smem>>
    %23 = vector.broadcast %22 : f32 to vector<2048xf32>
    %24 = arith.mulf %1, %23 : vector<2048xf32>
    %c1_12 = arith.constant 1 : index
    %25 = memref.load %arg2[%c1_12] : memref<10xf32, #tpu.memory_space<smem>>
    %26 = vector.broadcast %25 : f32 to vector<2048xf32>
    %27 = arith.addf %24, %26 : vector<2048xf32>
    %c1_13 = arith.constant 1 : index
    %c1_14 = arith.constant 1 : index
    %28 = memref.load %arg1[%c1_13, %c1_14] : memref<3x10xf32, #tpu.memory_space<smem>>
    %29 = vector.broadcast %28 : f32 to vector<2048xf32>
    %30 = arith.mulf %3, %29 : vector<2048xf32>
    %31 = arith.addf %27, %30 : vector<2048xf32>
    %c2_15 = arith.constant 2 : index
    %c1_16 = arith.constant 1 : index
    %32 = memref.load %arg1[%c2_15, %c1_16] : memref<3x10xf32, #tpu.memory_space<smem>>
    %33 = vector.broadcast %32 : f32 to vector<2048xf32>
    %34 = arith.mulf %5, %33 : vector<2048xf32>
    %35 = arith.addf %31, %34 : vector<2048xf32>
    %cst_17 = arith.constant 0.000000e+00 : f32
    %36 = vector.broadcast %cst_17 : f32 to vector<2048xf32>
    %37 = arith.maximumf %35, %36 : vector<2048xf32>
    %c0_18 = arith.constant 0 : index
    %c2_19 = arith.constant 2 : index
    %38 = memref.load %arg1[%c0_18, %c2_19] : memref<3x10xf32, #tpu.memory_space<smem>>
    %39 = vector.broadcast %38 : f32 to vector<2048xf32>
    %40 = arith.mulf %1, %39 : vector<2048xf32>
    %c2_20 = arith.constant 2 : index
    %41 = memref.load %arg2[%c2_20] : memref<10xf32, #tpu.memory_space<smem>>
    %42 = vector.broadcast %41 : f32 to vector<2048xf32>
    %43 = arith.addf %40, %42 : vector<2048xf32>
    %c1_21 = arith.constant 1 : index
    %c2_22 = arith.constant 2 : index
    %44 = memref.load %arg1[%c1_21, %c2_22] : memref<3x10xf32, #tpu.memory_space<smem>>
    %45 = vector.broadcast %44 : f32 to vector<2048xf32>
    %46 = arith.mulf %3, %45 : vector<2048xf32>
    %47 = arith.addf %43, %46 : vector<2048xf32>
    %c2_23 = arith.constant 2 : index
    %c2_24 = arith.constant 2 : index
    %48 = memref.load %arg1[%c2_23, %c2_24] : memref<3x10xf32, #tpu.memory_space<smem>>
    %49 = vector.broadcast %48 : f32 to vector<2048xf32>
    %50 = arith.mulf %5, %49 : vector<2048xf32>
    %51 = arith.addf %47, %50 : vector<2048xf32>
    %cst_25 = arith.constant 0.000000e+00 : f32
    %52 = vector.broadcast %cst_25 : f32 to vector<2048xf32>
    %53 = arith.maximumf %51, %52 : vector<2048xf32>
    %c0_26 = arith.constant 0 : index
    %c3 = arith.constant 3 : index
    %54 = memref.load %arg1[%c0_26, %c3] : memref<3x10xf32, #tpu.memory_space<smem>>
    %55 = vector.broadcast %54 : f32 to vector<2048xf32>
    %56 = arith.mulf %1, %55 : vector<2048xf32>
    %c3_27 = arith.constant 3 : index
    %57 = memref.load %arg2[%c3_27] : memref<10xf32, #tpu.memory_space<smem>>
    %58 = vector.broadcast %57 : f32 to vector<2048xf32>
    %59 = arith.addf %56, %58 : vector<2048xf32>
    %c1_28 = arith.constant 1 : index
    %c3_29 = arith.constant 3 : index
    %60 = memref.load %arg1[%c1_28, %c3_29] : memref<3x10xf32, #tpu.memory_space<smem>>
    %61 = vector.broadcast %60 : f32 to vector<2048xf32>
    %62 = arith.mulf %3, %61 : vector<2048xf32>
    %63 = arith.addf %59, %62 : vector<2048xf32>
    %c2_30 = arith.constant 2 : index
    %c3_31 = arith.constant 3 : index
    %64 = memref.load %arg1[%c2_30, %c3_31] : memref<3x10xf32, #tpu.memory_space<smem>>
    %65 = vector.broadcast %64 : f32 to vector<2048xf32>
    %66 = arith.mulf %5, %65 : vector<2048xf32>
    %67 = arith.addf %63, %66 : vector<2048xf32>
    %cst_32 = arith.constant 0.000000e+00 : f32
    %68 = vector.broadcast %cst_32 : f32 to vector<2048xf32>
    %69 = arith.maximumf %67, %68 : vector<2048xf32>
    %c0_33 = arith.constant 0 : index
    %c4 = arith.constant 4 : index
    %70 = memref.load %arg1[%c0_33, %c4] : memref<3x10xf32, #tpu.memory_space<smem>>
    %71 = vector.broadcast %70 : f32 to vector<2048xf32>
    %72 = arith.mulf %1, %71 : vector<2048xf32>
    %c4_34 = arith.constant 4 : index
    %73 = memref.load %arg2[%c4_34] : memref<10xf32, #tpu.memory_space<smem>>
    %74 = vector.broadcast %73 : f32 to vector<2048xf32>
    %75 = arith.addf %72, %74 : vector<2048xf32>
    %c1_35 = arith.constant 1 : index
    %c4_36 = arith.constant 4 : index
    %76 = memref.load %arg1[%c1_35, %c4_36] : memref<3x10xf32, #tpu.memory_space<smem>>
    %77 = vector.broadcast %76 : f32 to vector<2048xf32>
    %78 = arith.mulf %3, %77 : vector<2048xf32>
    %79 = arith.addf %75, %78 : vector<2048xf32>
    %c2_37 = arith.constant 2 : index
    %c4_38 = arith.constant 4 : index
    %80 = memref.load %arg1[%c2_37, %c4_38] : memref<3x10xf32, #tpu.memory_space<smem>>
    %81 = vector.broadcast %80 : f32 to vector<2048xf32>
    %82 = arith.mulf %5, %81 : vector<2048xf32>
    %83 = arith.addf %79, %82 : vector<2048xf32>
    %cst_39 = arith.constant 0.000000e+00 : f32
    %84 = vector.broadcast %cst_39 : f32 to vector<2048xf32>
    %85 = arith.maximumf %83, %84 : vector<2048xf32>
    %c0_40 = arith.constant 0 : index
    %c5 = arith.constant 5 : index
    %86 = memref.load %arg1[%c0_40, %c5] : memref<3x10xf32, #tpu.memory_space<smem>>
    %87 = vector.broadcast %86 : f32 to vector<2048xf32>
    %88 = arith.mulf %1, %87 : vector<2048xf32>
    %c5_41 = arith.constant 5 : index
    %89 = memref.load %arg2[%c5_41] : memref<10xf32, #tpu.memory_space<smem>>
    %90 = vector.broadcast %89 : f32 to vector<2048xf32>
    %91 = arith.addf %88, %90 : vector<2048xf32>
    %c1_42 = arith.constant 1 : index
    %c5_43 = arith.constant 5 : index
    %92 = memref.load %arg1[%c1_42, %c5_43] : memref<3x10xf32, #tpu.memory_space<smem>>
    %93 = vector.broadcast %92 : f32 to vector<2048xf32>
    %94 = arith.mulf %3, %93 : vector<2048xf32>
    %95 = arith.addf %91, %94 : vector<2048xf32>
    %c2_44 = arith.constant 2 : index
    %c5_45 = arith.constant 5 : index
    %96 = memref.load %arg1[%c2_44, %c5_45] : memref<3x10xf32, #tpu.memory_space<smem>>
    %97 = vector.broadcast %96 : f32 to vector<2048xf32>
    %98 = arith.mulf %5, %97 : vector<2048xf32>
    %99 = arith.addf %95, %98 : vector<2048xf32>
    %cst_46 = arith.constant 0.000000e+00 : f32
    %100 = vector.broadcast %cst_46 : f32 to vector<2048xf32>
    %101 = arith.maximumf %99, %100 : vector<2048xf32>
    %c0_47 = arith.constant 0 : index
    %c6 = arith.constant 6 : index
    %102 = memref.load %arg1[%c0_47, %c6] : memref<3x10xf32, #tpu.memory_space<smem>>
    %103 = vector.broadcast %102 : f32 to vector<2048xf32>
    %104 = arith.mulf %1, %103 : vector<2048xf32>
    %c6_48 = arith.constant 6 : index
    %105 = memref.load %arg2[%c6_48] : memref<10xf32, #tpu.memory_space<smem>>
    %106 = vector.broadcast %105 : f32 to vector<2048xf32>
    %107 = arith.addf %104, %106 : vector<2048xf32>
    %c1_49 = arith.constant 1 : index
    %c6_50 = arith.constant 6 : index
    %108 = memref.load %arg1[%c1_49, %c6_50] : memref<3x10xf32, #tpu.memory_space<smem>>
    %109 = vector.broadcast %108 : f32 to vector<2048xf32>
    %110 = arith.mulf %3, %109 : vector<2048xf32>
    %111 = arith.addf %107, %110 : vector<2048xf32>
    %c2_51 = arith.constant 2 : index
    %c6_52 = arith.constant 6 : index
    %112 = memref.load %arg1[%c2_51, %c6_52] : memref<3x10xf32, #tpu.memory_space<smem>>
    %113 = vector.broadcast %112 : f32 to vector<2048xf32>
    %114 = arith.mulf %5, %113 : vector<2048xf32>
    %115 = arith.addf %111, %114 : vector<2048xf32>
    %cst_53 = arith.constant 0.000000e+00 : f32
    %116 = vector.broadcast %cst_53 : f32 to vector<2048xf32>
    %117 = arith.maximumf %115, %116 : vector<2048xf32>
    %c0_54 = arith.constant 0 : index
    %c7 = arith.constant 7 : index
    %118 = memref.load %arg1[%c0_54, %c7] : memref<3x10xf32, #tpu.memory_space<smem>>
    %119 = vector.broadcast %118 : f32 to vector<2048xf32>
    %120 = arith.mulf %1, %119 : vector<2048xf32>
    %c7_55 = arith.constant 7 : index
    %121 = memref.load %arg2[%c7_55] : memref<10xf32, #tpu.memory_space<smem>>
    %122 = vector.broadcast %121 : f32 to vector<2048xf32>
    %123 = arith.addf %120, %122 : vector<2048xf32>
    %c1_56 = arith.constant 1 : index
    %c7_57 = arith.constant 7 : index
    %124 = memref.load %arg1[%c1_56, %c7_57] : memref<3x10xf32, #tpu.memory_space<smem>>
    %125 = vector.broadcast %124 : f32 to vector<2048xf32>
    %126 = arith.mulf %3, %125 : vector<2048xf32>
    %127 = arith.addf %123, %126 : vector<2048xf32>
    %c2_58 = arith.constant 2 : index
    %c7_59 = arith.constant 7 : index
    %128 = memref.load %arg1[%c2_58, %c7_59] : memref<3x10xf32, #tpu.memory_space<smem>>
    %129 = vector.broadcast %128 : f32 to vector<2048xf32>
    %130 = arith.mulf %5, %129 : vector<2048xf32>
    %131 = arith.addf %127, %130 : vector<2048xf32>
    %cst_60 = arith.constant 0.000000e+00 : f32
    %132 = vector.broadcast %cst_60 : f32 to vector<2048xf32>
    %133 = arith.maximumf %131, %132 : vector<2048xf32>
    %c0_61 = arith.constant 0 : index
    %c8 = arith.constant 8 : index
    %134 = memref.load %arg1[%c0_61, %c8] : memref<3x10xf32, #tpu.memory_space<smem>>
    %135 = vector.broadcast %134 : f32 to vector<2048xf32>
    %136 = arith.mulf %1, %135 : vector<2048xf32>
    %c8_62 = arith.constant 8 : index
    %137 = memref.load %arg2[%c8_62] : memref<10xf32, #tpu.memory_space<smem>>
    %138 = vector.broadcast %137 : f32 to vector<2048xf32>
    %139 = arith.addf %136, %138 : vector<2048xf32>
    %c1_63 = arith.constant 1 : index
    %c8_64 = arith.constant 8 : index
    %140 = memref.load %arg1[%c1_63, %c8_64] : memref<3x10xf32, #tpu.memory_space<smem>>
    %141 = vector.broadcast %140 : f32 to vector<2048xf32>
    %142 = arith.mulf %3, %141 : vector<2048xf32>
    %143 = arith.addf %139, %142 : vector<2048xf32>
    %c2_65 = arith.constant 2 : index
    %c8_66 = arith.constant 8 : index
    %144 = memref.load %arg1[%c2_65, %c8_66] : memref<3x10xf32, #tpu.memory_space<smem>>
    %145 = vector.broadcast %144 : f32 to vector<2048xf32>
    %146 = arith.mulf %5, %145 : vector<2048xf32>
    %147 = arith.addf %143, %146 : vector<2048xf32>
    %cst_67 = arith.constant 0.000000e+00 : f32
    %148 = vector.broadcast %cst_67 : f32 to vector<2048xf32>
    %149 = arith.maximumf %147, %148 : vector<2048xf32>
    %c0_68 = arith.constant 0 : index
    %c9 = arith.constant 9 : index
    %150 = memref.load %arg1[%c0_68, %c9] : memref<3x10xf32, #tpu.memory_space<smem>>
    %151 = vector.broadcast %150 : f32 to vector<2048xf32>
    %152 = arith.mulf %1, %151 : vector<2048xf32>
    %c9_69 = arith.constant 9 : index
    %153 = memref.load %arg2[%c9_69] : memref<10xf32, #tpu.memory_space<smem>>
    %154 = vector.broadcast %153 : f32 to vector<2048xf32>
    %155 = arith.addf %152, %154 : vector<2048xf32>
    %c1_70 = arith.constant 1 : index
    %c9_71 = arith.constant 9 : index
    %156 = memref.load %arg1[%c1_70, %c9_71] : memref<3x10xf32, #tpu.memory_space<smem>>
    %157 = vector.broadcast %156 : f32 to vector<2048xf32>
    %158 = arith.mulf %3, %157 : vector<2048xf32>
    %159 = arith.addf %155, %158 : vector<2048xf32>
    %c2_72 = arith.constant 2 : index
    %c9_73 = arith.constant 9 : index
    %160 = memref.load %arg1[%c2_72, %c9_73] : memref<3x10xf32, #tpu.memory_space<smem>>
    %161 = vector.broadcast %160 : f32 to vector<2048xf32>
    %162 = arith.mulf %5, %161 : vector<2048xf32>
    %163 = arith.addf %159, %162 : vector<2048xf32>
    %cst_74 = arith.constant 0.000000e+00 : f32
    %164 = vector.broadcast %cst_74 : f32 to vector<2048xf32>
    %165 = arith.maximumf %163, %164 : vector<2048xf32>
    %c0_75 = arith.constant 0 : index
    %c0_76 = arith.constant 0 : index
    %166 = memref.load %arg3[%c0_75, %c0_76] : memref<10x10xf32, #tpu.memory_space<smem>>
    %167 = vector.broadcast %166 : f32 to vector<2048xf32>
    %168 = arith.mulf %21, %167 : vector<2048xf32>
    %c0_77 = arith.constant 0 : index
    %169 = memref.load %arg4[%c0_77] : memref<10xf32, #tpu.memory_space<smem>>
    %170 = vector.broadcast %169 : f32 to vector<2048xf32>
    %171 = arith.addf %168, %170 : vector<2048xf32>
    %c1_78 = arith.constant 1 : index
    %c0_79 = arith.constant 0 : index
    %172 = memref.load %arg3[%c1_78, %c0_79] : memref<10x10xf32, #tpu.memory_space<smem>>
    %173 = vector.broadcast %172 : f32 to vector<2048xf32>
    %174 = arith.mulf %37, %173 : vector<2048xf32>
    %175 = arith.addf %171, %174 : vector<2048xf32>
    %c2_80 = arith.constant 2 : index
    %c0_81 = arith.constant 0 : index
    %176 = memref.load %arg3[%c2_80, %c0_81] : memref<10x10xf32, #tpu.memory_space<smem>>
    %177 = vector.broadcast %176 : f32 to vector<2048xf32>
    %178 = arith.mulf %53, %177 : vector<2048xf32>
    %179 = arith.addf %175, %178 : vector<2048xf32>
    %c3_82 = arith.constant 3 : index
    %c0_83 = arith.constant 0 : index
    %180 = memref.load %arg3[%c3_82, %c0_83] : memref<10x10xf32, #tpu.memory_space<smem>>
    %181 = vector.broadcast %180 : f32 to vector<2048xf32>
    %182 = arith.mulf %69, %181 : vector<2048xf32>
    %183 = arith.addf %179, %182 : vector<2048xf32>
    %c4_84 = arith.constant 4 : index
    %c0_85 = arith.constant 0 : index
    %184 = memref.load %arg3[%c4_84, %c0_85] : memref<10x10xf32, #tpu.memory_space<smem>>
    %185 = vector.broadcast %184 : f32 to vector<2048xf32>
    %186 = arith.mulf %85, %185 : vector<2048xf32>
    %187 = arith.addf %183, %186 : vector<2048xf32>
    %c5_86 = arith.constant 5 : index
    %c0_87 = arith.constant 0 : index
    %188 = memref.load %arg3[%c5_86, %c0_87] : memref<10x10xf32, #tpu.memory_space<smem>>
    %189 = vector.broadcast %188 : f32 to vector<2048xf32>
    %190 = arith.mulf %101, %189 : vector<2048xf32>
    %191 = arith.addf %187, %190 : vector<2048xf32>
    %c6_88 = arith.constant 6 : index
    %c0_89 = arith.constant 0 : index
    %192 = memref.load %arg3[%c6_88, %c0_89] : memref<10x10xf32, #tpu.memory_space<smem>>
    %193 = vector.broadcast %192 : f32 to vector<2048xf32>
    %194 = arith.mulf %117, %193 : vector<2048xf32>
    %195 = arith.addf %191, %194 : vector<2048xf32>
    %c7_90 = arith.constant 7 : index
    %c0_91 = arith.constant 0 : index
    %196 = memref.load %arg3[%c7_90, %c0_91] : memref<10x10xf32, #tpu.memory_space<smem>>
    %197 = vector.broadcast %196 : f32 to vector<2048xf32>
    %198 = arith.mulf %133, %197 : vector<2048xf32>
    %199 = arith.addf %195, %198 : vector<2048xf32>
    %c8_92 = arith.constant 8 : index
    %c0_93 = arith.constant 0 : index
    %200 = memref.load %arg3[%c8_92, %c0_93] : memref<10x10xf32, #tpu.memory_space<smem>>
    %201 = vector.broadcast %200 : f32 to vector<2048xf32>
    %202 = arith.mulf %149, %201 : vector<2048xf32>
    %203 = arith.addf %199, %202 : vector<2048xf32>
    %c9_94 = arith.constant 9 : index
    %c0_95 = arith.constant 0 : index
    %204 = memref.load %arg3[%c9_94, %c0_95] : memref<10x10xf32, #tpu.memory_space<smem>>
    %205 = vector.broadcast %204 : f32 to vector<2048xf32>
    %206 = arith.mulf %165, %205 : vector<2048xf32>
    %207 = arith.addf %203, %206 : vector<2048xf32>
    %cst_96 = arith.constant 0.000000e+00 : f32
    %208 = vector.broadcast %cst_96 : f32 to vector<2048xf32>
    %209 = arith.maximumf %207, %208 : vector<2048xf32>
    %c0_97 = arith.constant 0 : index
    %c1_98 = arith.constant 1 : index
    %210 = memref.load %arg3[%c0_97, %c1_98] : memref<10x10xf32, #tpu.memory_space<smem>>
    %211 = vector.broadcast %210 : f32 to vector<2048xf32>
    %212 = arith.mulf %21, %211 : vector<2048xf32>
    %c1_99 = arith.constant 1 : index
    %213 = memref.load %arg4[%c1_99] : memref<10xf32, #tpu.memory_space<smem>>
    %214 = vector.broadcast %213 : f32 to vector<2048xf32>
    %215 = arith.addf %212, %214 : vector<2048xf32>
    %c1_100 = arith.constant 1 : index
    %c1_101 = arith.constant 1 : index
    %216 = memref.load %arg3[%c1_100, %c1_101] : memref<10x10xf32, #tpu.memory_space<smem>>
    %217 = vector.broadcast %216 : f32 to vector<2048xf32>
    %218 = arith.mulf %37, %217 : vector<2048xf32>
    %219 = arith.addf %215, %218 : vector<2048xf32>
    %c2_102 = arith.constant 2 : index
    %c1_103 = arith.constant 1 : index
    %220 = memref.load %arg3[%c2_102, %c1_103] : memref<10x10xf32, #tpu.memory_space<smem>>
    %221 = vector.broadcast %220 : f32 to vector<2048xf32>
    %222 = arith.mulf %53, %221 : vector<2048xf32>
    %223 = arith.addf %219, %222 : vector<2048xf32>
    %c3_104 = arith.constant 3 : index
    %c1_105 = arith.constant 1 : index
    %224 = memref.load %arg3[%c3_104, %c1_105] : memref<10x10xf32, #tpu.memory_space<smem>>
    %225 = vector.broadcast %224 : f32 to vector<2048xf32>
    %226 = arith.mulf %69, %225 : vector<2048xf32>
    %227 = arith.addf %223, %226 : vector<2048xf32>
    %c4_106 = arith.constant 4 : index
    %c1_107 = arith.constant 1 : index
    %228 = memref.load %arg3[%c4_106, %c1_107] : memref<10x10xf32, #tpu.memory_space<smem>>
    %229 = vector.broadcast %228 : f32 to vector<2048xf32>
    %230 = arith.mulf %85, %229 : vector<2048xf32>
    %231 = arith.addf %227, %230 : vector<2048xf32>
    %c5_108 = arith.constant 5 : index
    %c1_109 = arith.constant 1 : index
    %232 = memref.load %arg3[%c5_108, %c1_109] : memref<10x10xf32, #tpu.memory_space<smem>>
    %233 = vector.broadcast %232 : f32 to vector<2048xf32>
    %234 = arith.mulf %101, %233 : vector<2048xf32>
    %235 = arith.addf %231, %234 : vector<2048xf32>
    %c6_110 = arith.constant 6 : index
    %c1_111 = arith.constant 1 : index
    %236 = memref.load %arg3[%c6_110, %c1_111] : memref<10x10xf32, #tpu.memory_space<smem>>
    %237 = vector.broadcast %236 : f32 to vector<2048xf32>
    %238 = arith.mulf %117, %237 : vector<2048xf32>
    %239 = arith.addf %235, %238 : vector<2048xf32>
    %c7_112 = arith.constant 7 : index
    %c1_113 = arith.constant 1 : index
    %240 = memref.load %arg3[%c7_112, %c1_113] : memref<10x10xf32, #tpu.memory_space<smem>>
    %241 = vector.broadcast %240 : f32 to vector<2048xf32>
    %242 = arith.mulf %133, %241 : vector<2048xf32>
    %243 = arith.addf %239, %242 : vector<2048xf32>
    %c8_114 = arith.constant 8 : index
    %c1_115 = arith.constant 1 : index
    %244 = memref.load %arg3[%c8_114, %c1_115] : memref<10x10xf32, #tpu.memory_space<smem>>
    %245 = vector.broadcast %244 : f32 to vector<2048xf32>
    %246 = arith.mulf %149, %245 : vector<2048xf32>
    %247 = arith.addf %243, %246 : vector<2048xf32>
    %c9_116 = arith.constant 9 : index
    %c1_117 = arith.constant 1 : index
    %248 = memref.load %arg3[%c9_116, %c1_117] : memref<10x10xf32, #tpu.memory_space<smem>>
    %249 = vector.broadcast %248 : f32 to vector<2048xf32>
    %250 = arith.mulf %165, %249 : vector<2048xf32>
    %251 = arith.addf %247, %250 : vector<2048xf32>
    %cst_118 = arith.constant 0.000000e+00 : f32
    %252 = vector.broadcast %cst_118 : f32 to vector<2048xf32>
    %253 = arith.maximumf %251, %252 : vector<2048xf32>
    %c0_119 = arith.constant 0 : index
    %c2_120 = arith.constant 2 : index
    %254 = memref.load %arg3[%c0_119, %c2_120] : memref<10x10xf32, #tpu.memory_space<smem>>
    %255 = vector.broadcast %254 : f32 to vector<2048xf32>
    %256 = arith.mulf %21, %255 : vector<2048xf32>
    %c2_121 = arith.constant 2 : index
    %257 = memref.load %arg4[%c2_121] : memref<10xf32, #tpu.memory_space<smem>>
    %258 = vector.broadcast %257 : f32 to vector<2048xf32>
    %259 = arith.addf %256, %258 : vector<2048xf32>
    %c1_122 = arith.constant 1 : index
    %c2_123 = arith.constant 2 : index
    %260 = memref.load %arg3[%c1_122, %c2_123] : memref<10x10xf32, #tpu.memory_space<smem>>
    %261 = vector.broadcast %260 : f32 to vector<2048xf32>
    %262 = arith.mulf %37, %261 : vector<2048xf32>
    %263 = arith.addf %259, %262 : vector<2048xf32>
    %c2_124 = arith.constant 2 : index
    %c2_125 = arith.constant 2 : index
    %264 = memref.load %arg3[%c2_124, %c2_125] : memref<10x10xf32, #tpu.memory_space<smem>>
    %265 = vector.broadcast %264 : f32 to vector<2048xf32>
    %266 = arith.mulf %53, %265 : vector<2048xf32>
    %267 = arith.addf %263, %266 : vector<2048xf32>
    %c3_126 = arith.constant 3 : index
    %c2_127 = arith.constant 2 : index
    %268 = memref.load %arg3[%c3_126, %c2_127] : memref<10x10xf32, #tpu.memory_space<smem>>
    %269 = vector.broadcast %268 : f32 to vector<2048xf32>
    %270 = arith.mulf %69, %269 : vector<2048xf32>
    %271 = arith.addf %267, %270 : vector<2048xf32>
    %c4_128 = arith.constant 4 : index
    %c2_129 = arith.constant 2 : index
    %272 = memref.load %arg3[%c4_128, %c2_129] : memref<10x10xf32, #tpu.memory_space<smem>>
    %273 = vector.broadcast %272 : f32 to vector<2048xf32>
    %274 = arith.mulf %85, %273 : vector<2048xf32>
    %275 = arith.addf %271, %274 : vector<2048xf32>
    %c5_130 = arith.constant 5 : index
    %c2_131 = arith.constant 2 : index
    %276 = memref.load %arg3[%c5_130, %c2_131] : memref<10x10xf32, #tpu.memory_space<smem>>
    %277 = vector.broadcast %276 : f32 to vector<2048xf32>
    %278 = arith.mulf %101, %277 : vector<2048xf32>
    %279 = arith.addf %275, %278 : vector<2048xf32>
    %c6_132 = arith.constant 6 : index
    %c2_133 = arith.constant 2 : index
    %280 = memref.load %arg3[%c6_132, %c2_133] : memref<10x10xf32, #tpu.memory_space<smem>>
    %281 = vector.broadcast %280 : f32 to vector<2048xf32>
    %282 = arith.mulf %117, %281 : vector<2048xf32>
    %283 = arith.addf %279, %282 : vector<2048xf32>
    %c7_134 = arith.constant 7 : index
    %c2_135 = arith.constant 2 : index
    %284 = memref.load %arg3[%c7_134, %c2_135] : memref<10x10xf32, #tpu.memory_space<smem>>
    %285 = vector.broadcast %284 : f32 to vector<2048xf32>
    %286 = arith.mulf %133, %285 : vector<2048xf32>
    %287 = arith.addf %283, %286 : vector<2048xf32>
    %c8_136 = arith.constant 8 : index
    %c2_137 = arith.constant 2 : index
    %288 = memref.load %arg3[%c8_136, %c2_137] : memref<10x10xf32, #tpu.memory_space<smem>>
    %289 = vector.broadcast %288 : f32 to vector<2048xf32>
    %290 = arith.mulf %149, %289 : vector<2048xf32>
    %291 = arith.addf %287, %290 : vector<2048xf32>
    %c9_138 = arith.constant 9 : index
    %c2_139 = arith.constant 2 : index
    %292 = memref.load %arg3[%c9_138, %c2_139] : memref<10x10xf32, #tpu.memory_space<smem>>
    %293 = vector.broadcast %292 : f32 to vector<2048xf32>
    %294 = arith.mulf %165, %293 : vector<2048xf32>
    %295 = arith.addf %291, %294 : vector<2048xf32>
    %cst_140 = arith.constant 0.000000e+00 : f32
    %296 = vector.broadcast %cst_140 : f32 to vector<2048xf32>
    %297 = arith.maximumf %295, %296 : vector<2048xf32>
    %c0_141 = arith.constant 0 : index
    %c3_142 = arith.constant 3 : index
    %298 = memref.load %arg3[%c0_141, %c3_142] : memref<10x10xf32, #tpu.memory_space<smem>>
    %299 = vector.broadcast %298 : f32 to vector<2048xf32>
    %300 = arith.mulf %21, %299 : vector<2048xf32>
    %c3_143 = arith.constant 3 : index
    %301 = memref.load %arg4[%c3_143] : memref<10xf32, #tpu.memory_space<smem>>
    %302 = vector.broadcast %301 : f32 to vector<2048xf32>
    %303 = arith.addf %300, %302 : vector<2048xf32>
    %c1_144 = arith.constant 1 : index
    %c3_145 = arith.constant 3 : index
    %304 = memref.load %arg3[%c1_144, %c3_145] : memref<10x10xf32, #tpu.memory_space<smem>>
    %305 = vector.broadcast %304 : f32 to vector<2048xf32>
    %306 = arith.mulf %37, %305 : vector<2048xf32>
    %307 = arith.addf %303, %306 : vector<2048xf32>
    %c2_146 = arith.constant 2 : index
    %c3_147 = arith.constant 3 : index
    %308 = memref.load %arg3[%c2_146, %c3_147] : memref<10x10xf32, #tpu.memory_space<smem>>
    %309 = vector.broadcast %308 : f32 to vector<2048xf32>
    %310 = arith.mulf %53, %309 : vector<2048xf32>
    %311 = arith.addf %307, %310 : vector<2048xf32>
    %c3_148 = arith.constant 3 : index
    %c3_149 = arith.constant 3 : index
    %312 = memref.load %arg3[%c3_148, %c3_149] : memref<10x10xf32, #tpu.memory_space<smem>>
    %313 = vector.broadcast %312 : f32 to vector<2048xf32>
    %314 = arith.mulf %69, %313 : vector<2048xf32>
    %315 = arith.addf %311, %314 : vector<2048xf32>
    %c4_150 = arith.constant 4 : index
    %c3_151 = arith.constant 3 : index
    %316 = memref.load %arg3[%c4_150, %c3_151] : memref<10x10xf32, #tpu.memory_space<smem>>
    %317 = vector.broadcast %316 : f32 to vector<2048xf32>
    %318 = arith.mulf %85, %317 : vector<2048xf32>
    %319 = arith.addf %315, %318 : vector<2048xf32>
    %c5_152 = arith.constant 5 : index
    %c3_153 = arith.constant 3 : index
    %320 = memref.load %arg3[%c5_152, %c3_153] : memref<10x10xf32, #tpu.memory_space<smem>>
    %321 = vector.broadcast %320 : f32 to vector<2048xf32>
    %322 = arith.mulf %101, %321 : vector<2048xf32>
    %323 = arith.addf %319, %322 : vector<2048xf32>
    %c6_154 = arith.constant 6 : index
    %c3_155 = arith.constant 3 : index
    %324 = memref.load %arg3[%c6_154, %c3_155] : memref<10x10xf32, #tpu.memory_space<smem>>
    %325 = vector.broadcast %324 : f32 to vector<2048xf32>
    %326 = arith.mulf %117, %325 : vector<2048xf32>
    %327 = arith.addf %323, %326 : vector<2048xf32>
    %c7_156 = arith.constant 7 : index
    %c3_157 = arith.constant 3 : index
    %328 = memref.load %arg3[%c7_156, %c3_157] : memref<10x10xf32, #tpu.memory_space<smem>>
    %329 = vector.broadcast %328 : f32 to vector<2048xf32>
    %330 = arith.mulf %133, %329 : vector<2048xf32>
    %331 = arith.addf %327, %330 : vector<2048xf32>
    %c8_158 = arith.constant 8 : index
    %c3_159 = arith.constant 3 : index
    %332 = memref.load %arg3[%c8_158, %c3_159] : memref<10x10xf32, #tpu.memory_space<smem>>
    %333 = vector.broadcast %332 : f32 to vector<2048xf32>
    %334 = arith.mulf %149, %333 : vector<2048xf32>
    %335 = arith.addf %331, %334 : vector<2048xf32>
    %c9_160 = arith.constant 9 : index
    %c3_161 = arith.constant 3 : index
    %336 = memref.load %arg3[%c9_160, %c3_161] : memref<10x10xf32, #tpu.memory_space<smem>>
    %337 = vector.broadcast %336 : f32 to vector<2048xf32>
    %338 = arith.mulf %165, %337 : vector<2048xf32>
    %339 = arith.addf %335, %338 : vector<2048xf32>
    %cst_162 = arith.constant 0.000000e+00 : f32
    %340 = vector.broadcast %cst_162 : f32 to vector<2048xf32>
    %341 = arith.maximumf %339, %340 : vector<2048xf32>
    %c0_163 = arith.constant 0 : index
    %c4_164 = arith.constant 4 : index
    %342 = memref.load %arg3[%c0_163, %c4_164] : memref<10x10xf32, #tpu.memory_space<smem>>
    %343 = vector.broadcast %342 : f32 to vector<2048xf32>
    %344 = arith.mulf %21, %343 : vector<2048xf32>
    %c4_165 = arith.constant 4 : index
    %345 = memref.load %arg4[%c4_165] : memref<10xf32, #tpu.memory_space<smem>>
    %346 = vector.broadcast %345 : f32 to vector<2048xf32>
    %347 = arith.addf %344, %346 : vector<2048xf32>
    %c1_166 = arith.constant 1 : index
    %c4_167 = arith.constant 4 : index
    %348 = memref.load %arg3[%c1_166, %c4_167] : memref<10x10xf32, #tpu.memory_space<smem>>
    %349 = vector.broadcast %348 : f32 to vector<2048xf32>
    %350 = arith.mulf %37, %349 : vector<2048xf32>
    %351 = arith.addf %347, %350 : vector<2048xf32>
    %c2_168 = arith.constant 2 : index
    %c4_169 = arith.constant 4 : index
    %352 = memref.load %arg3[%c2_168, %c4_169] : memref<10x10xf32, #tpu.memory_space<smem>>
    %353 = vector.broadcast %352 : f32 to vector<2048xf32>
    %354 = arith.mulf %53, %353 : vector<2048xf32>
    %355 = arith.addf %351, %354 : vector<2048xf32>
    %c3_170 = arith.constant 3 : index
    %c4_171 = arith.constant 4 : index
    %356 = memref.load %arg3[%c3_170, %c4_171] : memref<10x10xf32, #tpu.memory_space<smem>>
    %357 = vector.broadcast %356 : f32 to vector<2048xf32>
    %358 = arith.mulf %69, %357 : vector<2048xf32>
    %359 = arith.addf %355, %358 : vector<2048xf32>
    %c4_172 = arith.constant 4 : index
    %c4_173 = arith.constant 4 : index
    %360 = memref.load %arg3[%c4_172, %c4_173] : memref<10x10xf32, #tpu.memory_space<smem>>
    %361 = vector.broadcast %360 : f32 to vector<2048xf32>
    %362 = arith.mulf %85, %361 : vector<2048xf32>
    %363 = arith.addf %359, %362 : vector<2048xf32>
    %c5_174 = arith.constant 5 : index
    %c4_175 = arith.constant 4 : index
    %364 = memref.load %arg3[%c5_174, %c4_175] : memref<10x10xf32, #tpu.memory_space<smem>>
    %365 = vector.broadcast %364 : f32 to vector<2048xf32>
    %366 = arith.mulf %101, %365 : vector<2048xf32>
    %367 = arith.addf %363, %366 : vector<2048xf32>
    %c6_176 = arith.constant 6 : index
    %c4_177 = arith.constant 4 : index
    %368 = memref.load %arg3[%c6_176, %c4_177] : memref<10x10xf32, #tpu.memory_space<smem>>
    %369 = vector.broadcast %368 : f32 to vector<2048xf32>
    %370 = arith.mulf %117, %369 : vector<2048xf32>
    %371 = arith.addf %367, %370 : vector<2048xf32>
    %c7_178 = arith.constant 7 : index
    %c4_179 = arith.constant 4 : index
    %372 = memref.load %arg3[%c7_178, %c4_179] : memref<10x10xf32, #tpu.memory_space<smem>>
    %373 = vector.broadcast %372 : f32 to vector<2048xf32>
    %374 = arith.mulf %133, %373 : vector<2048xf32>
    %375 = arith.addf %371, %374 : vector<2048xf32>
    %c8_180 = arith.constant 8 : index
    %c4_181 = arith.constant 4 : index
    %376 = memref.load %arg3[%c8_180, %c4_181] : memref<10x10xf32, #tpu.memory_space<smem>>
    %377 = vector.broadcast %376 : f32 to vector<2048xf32>
    %378 = arith.mulf %149, %377 : vector<2048xf32>
    %379 = arith.addf %375, %378 : vector<2048xf32>
    %c9_182 = arith.constant 9 : index
    %c4_183 = arith.constant 4 : index
    %380 = memref.load %arg3[%c9_182, %c4_183] : memref<10x10xf32, #tpu.memory_space<smem>>
    %381 = vector.broadcast %380 : f32 to vector<2048xf32>
    %382 = arith.mulf %165, %381 : vector<2048xf32>
    %383 = arith.addf %379, %382 : vector<2048xf32>
    %cst_184 = arith.constant 0.000000e+00 : f32
    %384 = vector.broadcast %cst_184 : f32 to vector<2048xf32>
    %385 = arith.maximumf %383, %384 : vector<2048xf32>
    %c0_185 = arith.constant 0 : index
    %c5_186 = arith.constant 5 : index
    %386 = memref.load %arg3[%c0_185, %c5_186] : memref<10x10xf32, #tpu.memory_space<smem>>
    %387 = vector.broadcast %386 : f32 to vector<2048xf32>
    %388 = arith.mulf %21, %387 : vector<2048xf32>
    %c5_187 = arith.constant 5 : index
    %389 = memref.load %arg4[%c5_187] : memref<10xf32, #tpu.memory_space<smem>>
    %390 = vector.broadcast %389 : f32 to vector<2048xf32>
    %391 = arith.addf %388, %390 : vector<2048xf32>
    %c1_188 = arith.constant 1 : index
    %c5_189 = arith.constant 5 : index
    %392 = memref.load %arg3[%c1_188, %c5_189] : memref<10x10xf32, #tpu.memory_space<smem>>
    %393 = vector.broadcast %392 : f32 to vector<2048xf32>
    %394 = arith.mulf %37, %393 : vector<2048xf32>
    %395 = arith.addf %391, %394 : vector<2048xf32>
    %c2_190 = arith.constant 2 : index
    %c5_191 = arith.constant 5 : index
    %396 = memref.load %arg3[%c2_190, %c5_191] : memref<10x10xf32, #tpu.memory_space<smem>>
    %397 = vector.broadcast %396 : f32 to vector<2048xf32>
    %398 = arith.mulf %53, %397 : vector<2048xf32>
    %399 = arith.addf %395, %398 : vector<2048xf32>
    %c3_192 = arith.constant 3 : index
    %c5_193 = arith.constant 5 : index
    %400 = memref.load %arg3[%c3_192, %c5_193] : memref<10x10xf32, #tpu.memory_space<smem>>
    %401 = vector.broadcast %400 : f32 to vector<2048xf32>
    %402 = arith.mulf %69, %401 : vector<2048xf32>
    %403 = arith.addf %399, %402 : vector<2048xf32>
    %c4_194 = arith.constant 4 : index
    %c5_195 = arith.constant 5 : index
    %404 = memref.load %arg3[%c4_194, %c5_195] : memref<10x10xf32, #tpu.memory_space<smem>>
    %405 = vector.broadcast %404 : f32 to vector<2048xf32>
    %406 = arith.mulf %85, %405 : vector<2048xf32>
    %407 = arith.addf %403, %406 : vector<2048xf32>
    %c5_196 = arith.constant 5 : index
    %c5_197 = arith.constant 5 : index
    %408 = memref.load %arg3[%c5_196, %c5_197] : memref<10x10xf32, #tpu.memory_space<smem>>
    %409 = vector.broadcast %408 : f32 to vector<2048xf32>
    %410 = arith.mulf %101, %409 : vector<2048xf32>
    %411 = arith.addf %407, %410 : vector<2048xf32>
    %c6_198 = arith.constant 6 : index
    %c5_199 = arith.constant 5 : index
    %412 = memref.load %arg3[%c6_198, %c5_199] : memref<10x10xf32, #tpu.memory_space<smem>>
    %413 = vector.broadcast %412 : f32 to vector<2048xf32>
    %414 = arith.mulf %117, %413 : vector<2048xf32>
    %415 = arith.addf %411, %414 : vector<2048xf32>
    %c7_200 = arith.constant 7 : index
    %c5_201 = arith.constant 5 : index
    %416 = memref.load %arg3[%c7_200, %c5_201] : memref<10x10xf32, #tpu.memory_space<smem>>
    %417 = vector.broadcast %416 : f32 to vector<2048xf32>
    %418 = arith.mulf %133, %417 : vector<2048xf32>
    %419 = arith.addf %415, %418 : vector<2048xf32>
    %c8_202 = arith.constant 8 : index
    %c5_203 = arith.constant 5 : index
    %420 = memref.load %arg3[%c8_202, %c5_203] : memref<10x10xf32, #tpu.memory_space<smem>>
    %421 = vector.broadcast %420 : f32 to vector<2048xf32>
    %422 = arith.mulf %149, %421 : vector<2048xf32>
    %423 = arith.addf %419, %422 : vector<2048xf32>
    %c9_204 = arith.constant 9 : index
    %c5_205 = arith.constant 5 : index
    %424 = memref.load %arg3[%c9_204, %c5_205] : memref<10x10xf32, #tpu.memory_space<smem>>
    %425 = vector.broadcast %424 : f32 to vector<2048xf32>
    %426 = arith.mulf %165, %425 : vector<2048xf32>
    %427 = arith.addf %423, %426 : vector<2048xf32>
    %cst_206 = arith.constant 0.000000e+00 : f32
    %428 = vector.broadcast %cst_206 : f32 to vector<2048xf32>
    %429 = arith.maximumf %427, %428 : vector<2048xf32>
    %c0_207 = arith.constant 0 : index
    %c6_208 = arith.constant 6 : index
    %430 = memref.load %arg3[%c0_207, %c6_208] : memref<10x10xf32, #tpu.memory_space<smem>>
    %431 = vector.broadcast %430 : f32 to vector<2048xf32>
    %432 = arith.mulf %21, %431 : vector<2048xf32>
    %c6_209 = arith.constant 6 : index
    %433 = memref.load %arg4[%c6_209] : memref<10xf32, #tpu.memory_space<smem>>
    %434 = vector.broadcast %433 : f32 to vector<2048xf32>
    %435 = arith.addf %432, %434 : vector<2048xf32>
    %c1_210 = arith.constant 1 : index
    %c6_211 = arith.constant 6 : index
    %436 = memref.load %arg3[%c1_210, %c6_211] : memref<10x10xf32, #tpu.memory_space<smem>>
    %437 = vector.broadcast %436 : f32 to vector<2048xf32>
    %438 = arith.mulf %37, %437 : vector<2048xf32>
    %439 = arith.addf %435, %438 : vector<2048xf32>
    %c2_212 = arith.constant 2 : index
    %c6_213 = arith.constant 6 : index
    %440 = memref.load %arg3[%c2_212, %c6_213] : memref<10x10xf32, #tpu.memory_space<smem>>
    %441 = vector.broadcast %440 : f32 to vector<2048xf32>
    %442 = arith.mulf %53, %441 : vector<2048xf32>
    %443 = arith.addf %439, %442 : vector<2048xf32>
    %c3_214 = arith.constant 3 : index
    %c6_215 = arith.constant 6 : index
    %444 = memref.load %arg3[%c3_214, %c6_215] : memref<10x10xf32, #tpu.memory_space<smem>>
    %445 = vector.broadcast %444 : f32 to vector<2048xf32>
    %446 = arith.mulf %69, %445 : vector<2048xf32>
    %447 = arith.addf %443, %446 : vector<2048xf32>
    %c4_216 = arith.constant 4 : index
    %c6_217 = arith.constant 6 : index
    %448 = memref.load %arg3[%c4_216, %c6_217] : memref<10x10xf32, #tpu.memory_space<smem>>
    %449 = vector.broadcast %448 : f32 to vector<2048xf32>
    %450 = arith.mulf %85, %449 : vector<2048xf32>
    %451 = arith.addf %447, %450 : vector<2048xf32>
    %c5_218 = arith.constant 5 : index
    %c6_219 = arith.constant 6 : index
    %452 = memref.load %arg3[%c5_218, %c6_219] : memref<10x10xf32, #tpu.memory_space<smem>>
    %453 = vector.broadcast %452 : f32 to vector<2048xf32>
    %454 = arith.mulf %101, %453 : vector<2048xf32>
    %455 = arith.addf %451, %454 : vector<2048xf32>
    %c6_220 = arith.constant 6 : index
    %c6_221 = arith.constant 6 : index
    %456 = memref.load %arg3[%c6_220, %c6_221] : memref<10x10xf32, #tpu.memory_space<smem>>
    %457 = vector.broadcast %456 : f32 to vector<2048xf32>
    %458 = arith.mulf %117, %457 : vector<2048xf32>
    %459 = arith.addf %455, %458 : vector<2048xf32>
    %c7_222 = arith.constant 7 : index
    %c6_223 = arith.constant 6 : index
    %460 = memref.load %arg3[%c7_222, %c6_223] : memref<10x10xf32, #tpu.memory_space<smem>>
    %461 = vector.broadcast %460 : f32 to vector<2048xf32>
    %462 = arith.mulf %133, %461 : vector<2048xf32>
    %463 = arith.addf %459, %462 : vector<2048xf32>
    %c8_224 = arith.constant 8 : index
    %c6_225 = arith.constant 6 : index
    %464 = memref.load %arg3[%c8_224, %c6_225] : memref<10x10xf32, #tpu.memory_space<smem>>
    %465 = vector.broadcast %464 : f32 to vector<2048xf32>
    %466 = arith.mulf %149, %465 : vector<2048xf32>
    %467 = arith.addf %463, %466 : vector<2048xf32>
    %c9_226 = arith.constant 9 : index
    %c6_227 = arith.constant 6 : index
    %468 = memref.load %arg3[%c9_226, %c6_227] : memref<10x10xf32, #tpu.memory_space<smem>>
    %469 = vector.broadcast %468 : f32 to vector<2048xf32>
    %470 = arith.mulf %165, %469 : vector<2048xf32>
    %471 = arith.addf %467, %470 : vector<2048xf32>
    %cst_228 = arith.constant 0.000000e+00 : f32
    %472 = vector.broadcast %cst_228 : f32 to vector<2048xf32>
    %473 = arith.maximumf %471, %472 : vector<2048xf32>
    %c0_229 = arith.constant 0 : index
    %c7_230 = arith.constant 7 : index
    %474 = memref.load %arg3[%c0_229, %c7_230] : memref<10x10xf32, #tpu.memory_space<smem>>
    %475 = vector.broadcast %474 : f32 to vector<2048xf32>
    %476 = arith.mulf %21, %475 : vector<2048xf32>
    %c7_231 = arith.constant 7 : index
    %477 = memref.load %arg4[%c7_231] : memref<10xf32, #tpu.memory_space<smem>>
    %478 = vector.broadcast %477 : f32 to vector<2048xf32>
    %479 = arith.addf %476, %478 : vector<2048xf32>
    %c1_232 = arith.constant 1 : index
    %c7_233 = arith.constant 7 : index
    %480 = memref.load %arg3[%c1_232, %c7_233] : memref<10x10xf32, #tpu.memory_space<smem>>
    %481 = vector.broadcast %480 : f32 to vector<2048xf32>
    %482 = arith.mulf %37, %481 : vector<2048xf32>
    %483 = arith.addf %479, %482 : vector<2048xf32>
    %c2_234 = arith.constant 2 : index
    %c7_235 = arith.constant 7 : index
    %484 = memref.load %arg3[%c2_234, %c7_235] : memref<10x10xf32, #tpu.memory_space<smem>>
    %485 = vector.broadcast %484 : f32 to vector<2048xf32>
    %486 = arith.mulf %53, %485 : vector<2048xf32>
    %487 = arith.addf %483, %486 : vector<2048xf32>
    %c3_236 = arith.constant 3 : index
    %c7_237 = arith.constant 7 : index
    %488 = memref.load %arg3[%c3_236, %c7_237] : memref<10x10xf32, #tpu.memory_space<smem>>
    %489 = vector.broadcast %488 : f32 to vector<2048xf32>
    %490 = arith.mulf %69, %489 : vector<2048xf32>
    %491 = arith.addf %487, %490 : vector<2048xf32>
    %c4_238 = arith.constant 4 : index
    %c7_239 = arith.constant 7 : index
    %492 = memref.load %arg3[%c4_238, %c7_239] : memref<10x10xf32, #tpu.memory_space<smem>>
    %493 = vector.broadcast %492 : f32 to vector<2048xf32>
    %494 = arith.mulf %85, %493 : vector<2048xf32>
    %495 = arith.addf %491, %494 : vector<2048xf32>
    %c5_240 = arith.constant 5 : index
    %c7_241 = arith.constant 7 : index
    %496 = memref.load %arg3[%c5_240, %c7_241] : memref<10x10xf32, #tpu.memory_space<smem>>
    %497 = vector.broadcast %496 : f32 to vector<2048xf32>
    %498 = arith.mulf %101, %497 : vector<2048xf32>
    %499 = arith.addf %495, %498 : vector<2048xf32>
    %c6_242 = arith.constant 6 : index
    %c7_243 = arith.constant 7 : index
    %500 = memref.load %arg3[%c6_242, %c7_243] : memref<10x10xf32, #tpu.memory_space<smem>>
    %501 = vector.broadcast %500 : f32 to vector<2048xf32>
    %502 = arith.mulf %117, %501 : vector<2048xf32>
    %503 = arith.addf %499, %502 : vector<2048xf32>
    %c7_244 = arith.constant 7 : index
    %c7_245 = arith.constant 7 : index
    %504 = memref.load %arg3[%c7_244, %c7_245] : memref<10x10xf32, #tpu.memory_space<smem>>
    %505 = vector.broadcast %504 : f32 to vector<2048xf32>
    %506 = arith.mulf %133, %505 : vector<2048xf32>
    %507 = arith.addf %503, %506 : vector<2048xf32>
    %c8_246 = arith.constant 8 : index
    %c7_247 = arith.constant 7 : index
    %508 = memref.load %arg3[%c8_246, %c7_247] : memref<10x10xf32, #tpu.memory_space<smem>>
    %509 = vector.broadcast %508 : f32 to vector<2048xf32>
    %510 = arith.mulf %149, %509 : vector<2048xf32>
    %511 = arith.addf %507, %510 : vector<2048xf32>
    %c9_248 = arith.constant 9 : index
    %c7_249 = arith.constant 7 : index
    %512 = memref.load %arg3[%c9_248, %c7_249] : memref<10x10xf32, #tpu.memory_space<smem>>
    %513 = vector.broadcast %512 : f32 to vector<2048xf32>
    %514 = arith.mulf %165, %513 : vector<2048xf32>
    %515 = arith.addf %511, %514 : vector<2048xf32>
    %cst_250 = arith.constant 0.000000e+00 : f32
    %516 = vector.broadcast %cst_250 : f32 to vector<2048xf32>
    %517 = arith.maximumf %515, %516 : vector<2048xf32>
    %c0_251 = arith.constant 0 : index
    %c8_252 = arith.constant 8 : index
    %518 = memref.load %arg3[%c0_251, %c8_252] : memref<10x10xf32, #tpu.memory_space<smem>>
    %519 = vector.broadcast %518 : f32 to vector<2048xf32>
    %520 = arith.mulf %21, %519 : vector<2048xf32>
    %c8_253 = arith.constant 8 : index
    %521 = memref.load %arg4[%c8_253] : memref<10xf32, #tpu.memory_space<smem>>
    %522 = vector.broadcast %521 : f32 to vector<2048xf32>
    %523 = arith.addf %520, %522 : vector<2048xf32>
    %c1_254 = arith.constant 1 : index
    %c8_255 = arith.constant 8 : index
    %524 = memref.load %arg3[%c1_254, %c8_255] : memref<10x10xf32, #tpu.memory_space<smem>>
    %525 = vector.broadcast %524 : f32 to vector<2048xf32>
    %526 = arith.mulf %37, %525 : vector<2048xf32>
    %527 = arith.addf %523, %526 : vector<2048xf32>
    %c2_256 = arith.constant 2 : index
    %c8_257 = arith.constant 8 : index
    %528 = memref.load %arg3[%c2_256, %c8_257] : memref<10x10xf32, #tpu.memory_space<smem>>
    %529 = vector.broadcast %528 : f32 to vector<2048xf32>
    %530 = arith.mulf %53, %529 : vector<2048xf32>
    %531 = arith.addf %527, %530 : vector<2048xf32>
    %c3_258 = arith.constant 3 : index
    %c8_259 = arith.constant 8 : index
    %532 = memref.load %arg3[%c3_258, %c8_259] : memref<10x10xf32, #tpu.memory_space<smem>>
    %533 = vector.broadcast %532 : f32 to vector<2048xf32>
    %534 = arith.mulf %69, %533 : vector<2048xf32>
    %535 = arith.addf %531, %534 : vector<2048xf32>
    %c4_260 = arith.constant 4 : index
    %c8_261 = arith.constant 8 : index
    %536 = memref.load %arg3[%c4_260, %c8_261] : memref<10x10xf32, #tpu.memory_space<smem>>
    %537 = vector.broadcast %536 : f32 to vector<2048xf32>
    %538 = arith.mulf %85, %537 : vector<2048xf32>
    %539 = arith.addf %535, %538 : vector<2048xf32>
    %c5_262 = arith.constant 5 : index
    %c8_263 = arith.constant 8 : index
    %540 = memref.load %arg3[%c5_262, %c8_263] : memref<10x10xf32, #tpu.memory_space<smem>>
    %541 = vector.broadcast %540 : f32 to vector<2048xf32>
    %542 = arith.mulf %101, %541 : vector<2048xf32>
    %543 = arith.addf %539, %542 : vector<2048xf32>
    %c6_264 = arith.constant 6 : index
    %c8_265 = arith.constant 8 : index
    %544 = memref.load %arg3[%c6_264, %c8_265] : memref<10x10xf32, #tpu.memory_space<smem>>
    %545 = vector.broadcast %544 : f32 to vector<2048xf32>
    %546 = arith.mulf %117, %545 : vector<2048xf32>
    %547 = arith.addf %543, %546 : vector<2048xf32>
    %c7_266 = arith.constant 7 : index
    %c8_267 = arith.constant 8 : index
    %548 = memref.load %arg3[%c7_266, %c8_267] : memref<10x10xf32, #tpu.memory_space<smem>>
    %549 = vector.broadcast %548 : f32 to vector<2048xf32>
    %550 = arith.mulf %133, %549 : vector<2048xf32>
    %551 = arith.addf %547, %550 : vector<2048xf32>
    %c8_268 = arith.constant 8 : index
    %c8_269 = arith.constant 8 : index
    %552 = memref.load %arg3[%c8_268, %c8_269] : memref<10x10xf32, #tpu.memory_space<smem>>
    %553 = vector.broadcast %552 : f32 to vector<2048xf32>
    %554 = arith.mulf %149, %553 : vector<2048xf32>
    %555 = arith.addf %551, %554 : vector<2048xf32>
    %c9_270 = arith.constant 9 : index
    %c8_271 = arith.constant 8 : index
    %556 = memref.load %arg3[%c9_270, %c8_271] : memref<10x10xf32, #tpu.memory_space<smem>>
    %557 = vector.broadcast %556 : f32 to vector<2048xf32>
    %558 = arith.mulf %165, %557 : vector<2048xf32>
    %559 = arith.addf %555, %558 : vector<2048xf32>
    %cst_272 = arith.constant 0.000000e+00 : f32
    %560 = vector.broadcast %cst_272 : f32 to vector<2048xf32>
    %561 = arith.maximumf %559, %560 : vector<2048xf32>
    %c0_273 = arith.constant 0 : index
    %c9_274 = arith.constant 9 : index
    %562 = memref.load %arg3[%c0_273, %c9_274] : memref<10x10xf32, #tpu.memory_space<smem>>
    %563 = vector.broadcast %562 : f32 to vector<2048xf32>
    %564 = arith.mulf %21, %563 : vector<2048xf32>
    %c9_275 = arith.constant 9 : index
    %565 = memref.load %arg4[%c9_275] : memref<10xf32, #tpu.memory_space<smem>>
    %566 = vector.broadcast %565 : f32 to vector<2048xf32>
    %567 = arith.addf %564, %566 : vector<2048xf32>
    %c1_276 = arith.constant 1 : index
    %c9_277 = arith.constant 9 : index
    %568 = memref.load %arg3[%c1_276, %c9_277] : memref<10x10xf32, #tpu.memory_space<smem>>
    %569 = vector.broadcast %568 : f32 to vector<2048xf32>
    %570 = arith.mulf %37, %569 : vector<2048xf32>
    %571 = arith.addf %567, %570 : vector<2048xf32>
    %c2_278 = arith.constant 2 : index
    %c9_279 = arith.constant 9 : index
    %572 = memref.load %arg3[%c2_278, %c9_279] : memref<10x10xf32, #tpu.memory_space<smem>>
    %573 = vector.broadcast %572 : f32 to vector<2048xf32>
    %574 = arith.mulf %53, %573 : vector<2048xf32>
    %575 = arith.addf %571, %574 : vector<2048xf32>
    %c3_280 = arith.constant 3 : index
    %c9_281 = arith.constant 9 : index
    %576 = memref.load %arg3[%c3_280, %c9_281] : memref<10x10xf32, #tpu.memory_space<smem>>
    %577 = vector.broadcast %576 : f32 to vector<2048xf32>
    %578 = arith.mulf %69, %577 : vector<2048xf32>
    %579 = arith.addf %575, %578 : vector<2048xf32>
    %c4_282 = arith.constant 4 : index
    %c9_283 = arith.constant 9 : index
    %580 = memref.load %arg3[%c4_282, %c9_283] : memref<10x10xf32, #tpu.memory_space<smem>>
    %581 = vector.broadcast %580 : f32 to vector<2048xf32>
    %582 = arith.mulf %85, %581 : vector<2048xf32>
    %583 = arith.addf %579, %582 : vector<2048xf32>
    %c5_284 = arith.constant 5 : index
    %c9_285 = arith.constant 9 : index
    %584 = memref.load %arg3[%c5_284, %c9_285] : memref<10x10xf32, #tpu.memory_space<smem>>
    %585 = vector.broadcast %584 : f32 to vector<2048xf32>
    %586 = arith.mulf %101, %585 : vector<2048xf32>
    %587 = arith.addf %583, %586 : vector<2048xf32>
    %c6_286 = arith.constant 6 : index
    %c9_287 = arith.constant 9 : index
    %588 = memref.load %arg3[%c6_286, %c9_287] : memref<10x10xf32, #tpu.memory_space<smem>>
    %589 = vector.broadcast %588 : f32 to vector<2048xf32>
    %590 = arith.mulf %117, %589 : vector<2048xf32>
    %591 = arith.addf %587, %590 : vector<2048xf32>
    %c7_288 = arith.constant 7 : index
    %c9_289 = arith.constant 9 : index
    %592 = memref.load %arg3[%c7_288, %c9_289] : memref<10x10xf32, #tpu.memory_space<smem>>
    %593 = vector.broadcast %592 : f32 to vector<2048xf32>
    %594 = arith.mulf %133, %593 : vector<2048xf32>
    %595 = arith.addf %591, %594 : vector<2048xf32>
    %c8_290 = arith.constant 8 : index
    %c9_291 = arith.constant 9 : index
    %596 = memref.load %arg3[%c8_290, %c9_291] : memref<10x10xf32, #tpu.memory_space<smem>>
    %597 = vector.broadcast %596 : f32 to vector<2048xf32>
    %598 = arith.mulf %149, %597 : vector<2048xf32>
    %599 = arith.addf %595, %598 : vector<2048xf32>
    %c9_292 = arith.constant 9 : index
    %c9_293 = arith.constant 9 : index
    %600 = memref.load %arg3[%c9_292, %c9_293] : memref<10x10xf32, #tpu.memory_space<smem>>
    %601 = vector.broadcast %600 : f32 to vector<2048xf32>
    %602 = arith.mulf %165, %601 : vector<2048xf32>
    %603 = arith.addf %599, %602 : vector<2048xf32>
    %cst_294 = arith.constant 0.000000e+00 : f32
    %604 = vector.broadcast %cst_294 : f32 to vector<2048xf32>
    %605 = arith.maximumf %603, %604 : vector<2048xf32>
    %c0_295 = arith.constant 0 : index
    %606 = memref.load %arg5[%c0_295] : memref<10xf32, #tpu.memory_space<smem>>
    %607 = vector.broadcast %606 : f32 to vector<2048xf32>
    %608 = arith.mulf %209, %607 : vector<2048xf32>
    %c0_296 = arith.constant 0 : index
    %609 = memref.load %arg6[%c0_296] : memref<1xf32, #tpu.memory_space<smem>>
    %610 = vector.broadcast %609 : f32 to vector<2048xf32>
    %611 = arith.addf %608, %610 : vector<2048xf32>
    %c1_297 = arith.constant 1 : index
    %612 = memref.load %arg5[%c1_297] : memref<10xf32, #tpu.memory_space<smem>>
    %613 = vector.broadcast %612 : f32 to vector<2048xf32>
    %614 = arith.mulf %253, %613 : vector<2048xf32>
    %615 = arith.addf %611, %614 : vector<2048xf32>
    %c2_298 = arith.constant 2 : index
    %616 = memref.load %arg5[%c2_298] : memref<10xf32, #tpu.memory_space<smem>>
    %617 = vector.broadcast %616 : f32 to vector<2048xf32>
    %618 = arith.mulf %297, %617 : vector<2048xf32>
    %619 = arith.addf %615, %618 : vector<2048xf32>
    %c3_299 = arith.constant 3 : index
    %620 = memref.load %arg5[%c3_299] : memref<10xf32, #tpu.memory_space<smem>>
    %621 = vector.broadcast %620 : f32 to vector<2048xf32>
    %622 = arith.mulf %341, %621 : vector<2048xf32>
    %623 = arith.addf %619, %622 : vector<2048xf32>
    %c4_300 = arith.constant 4 : index
    %624 = memref.load %arg5[%c4_300] : memref<10xf32, #tpu.memory_space<smem>>
    %625 = vector.broadcast %624 : f32 to vector<2048xf32>
    %626 = arith.mulf %385, %625 : vector<2048xf32>
    %627 = arith.addf %623, %626 : vector<2048xf32>
    %c5_301 = arith.constant 5 : index
    %628 = memref.load %arg5[%c5_301] : memref<10xf32, #tpu.memory_space<smem>>
    %629 = vector.broadcast %628 : f32 to vector<2048xf32>
    %630 = arith.mulf %429, %629 : vector<2048xf32>
    %631 = arith.addf %627, %630 : vector<2048xf32>
    %c6_302 = arith.constant 6 : index
    %632 = memref.load %arg5[%c6_302] : memref<10xf32, #tpu.memory_space<smem>>
    %633 = vector.broadcast %632 : f32 to vector<2048xf32>
    %634 = arith.mulf %473, %633 : vector<2048xf32>
    %635 = arith.addf %631, %634 : vector<2048xf32>
    %c7_303 = arith.constant 7 : index
    %636 = memref.load %arg5[%c7_303] : memref<10xf32, #tpu.memory_space<smem>>
    %637 = vector.broadcast %636 : f32 to vector<2048xf32>
    %638 = arith.mulf %517, %637 : vector<2048xf32>
    %639 = arith.addf %635, %638 : vector<2048xf32>
    %c8_304 = arith.constant 8 : index
    %640 = memref.load %arg5[%c8_304] : memref<10xf32, #tpu.memory_space<smem>>
    %641 = vector.broadcast %640 : f32 to vector<2048xf32>
    %642 = arith.mulf %561, %641 : vector<2048xf32>
    %643 = arith.addf %639, %642 : vector<2048xf32>
    %c9_305 = arith.constant 9 : index
    %644 = memref.load %arg5[%c9_305] : memref<10xf32, #tpu.memory_space<smem>>
    %645 = vector.broadcast %644 : f32 to vector<2048xf32>
    %646 = arith.mulf %605, %645 : vector<2048xf32>
    %647 = arith.addf %643, %646 : vector<2048xf32>
    %648 = arith.negf %647 : vector<2048xf32>
    %649 = math.exp %648 : vector<2048xf32>
    %cst_306 = arith.constant 1.000000e+00 : f32
    %650 = vector.broadcast %cst_306 : f32 to vector<2048xf32>
    %651 = arith.addf %650, %649 : vector<2048xf32>
    %652 = arith.divf %650, %651 : vector<2048xf32>
    %c0_307 = arith.constant 0 : index
    %c0_308 = arith.constant 0 : index
    %653 = vector.load %arg8[%c0_307, %c0_308] : memref<1x2048xf32, #tpu.memory_space<vmem>>, vector<1x2048xf32>
    %654 = vector.shape_cast %653 : vector<1x2048xf32> to vector<2048xf32>
    %655 = vector.shape_cast %652 : vector<2048xf32> to vector<1x2048xf32>
    tpu.vector_store %arg8[%c0_307, %c0_308], %655 {strides = array<i32>} : memref<1x2048xf32, #tpu.memory_space<vmem>>, vector<1x2048xf32>,
    return
  }
  func.func @transform_0(%arg0: i32) -> (i32, i32) {
    %c0_i32 = arith.constant 0 : i32
    %c0_i32_0 = arith.constant 0 : i32
    %c0_i32_1 = arith.constant 0 : i32
    return %c0_i32, %c0_i32_0 : i32, i32
  }
  func.func @transform_1(%arg0: i32) -> i32 {
    %c0_i32 = arith.constant 0 : i32
    %c0_i32_0 = arith.constant 0 : i32
    return %c0_i32 : i32
  }
  func.func @transform_2(%arg0: i32) -> (i32, i32) {
    %c0_i32 = arith.constant 0 : i32
    %c0_i32_0 = arith.constant 0 : i32
    %c0_i32_1 = arith.constant 0 : i32
    return %c0_i32, %c0_i32_0 : i32, i32
  }
  func.func @transform_3(%arg0: i32) -> i32 {
    %c0_i32 = arith.constant 0 : i32
    %c0_i32_0 = arith.constant 0 : i32
    return %c0_i32 : i32
  }
  func.func @transform_4(%arg0: i32) -> i32 {
    %c0_i32 = arith.constant 0 : i32
    %c0_i32_0 = arith.constant 0 : i32
    return %c0_i32 : i32
  }
  func.func @transform_5(%arg0: i32) -> i32 {
    %c0_i32 = arith.constant 0 : i32
    %c0_i32_0 = arith.constant 0 : i32
    return %c0_i32 : i32
  }
  func.func @transform_6(%arg0: i32) -> (i32, i32) {
    %c0_i32 = arith.constant 0 : i32
    %c0_i32_0 = arith.constant 0 : i32
    return %c0_i32, %arg0 : i32, i32
  }
  func.func @transform_7(%arg0: i32) -> (i32, i32) {
    %c0_i32 = arith.constant 0 : i32
    %c0_i32_0 = arith.constant 0 : i32
    return %c0_i32, %arg0 : i32, i32
  }
}

</mosaic_0001>

<llo_original>
// kernel: tpu_custom_call.1
$region0: #{tpu_custom_call.1}
  #allocation0 [shape = 'u32[]', space=smem, size = 0x4, offset = 0x4, fixed_abs, tag = 'smem constant byte address 0x4 - core index']
  #allocation1 [shape = 'u32[144,128]{1,0:T(1,128)}', space=vmem, size = 0x12000, scoped, tag = 'internal scratch']
  #allocation2 [shape = 'f32[1]{0:T(128)S(6)}', space=smem, size = 0x200, scoped, tag = 'scoped memory for tpu_custom_call.1']
  %s0 = inlined_call_operand.hbm [shape: f32[3,10], index: 0, kind: input, shape index: {}]
  %s1 = inlined_call_operand.vmem [shape: f32[10], index: 1, kind: input, shape index: {}]
  %s2 = inlined_call_operand.hbm [shape: f32[10,10], index: 2, kind: input, shape index: {}]
  %s3 = inlined_call_operand.vmem [shape: f32[10], index: 3, kind: input, shape index: {}]
  %s4 = inlined_call_operand.vmem [shape: f32[10], index: 4, kind: input, shape index: {}]
  %s5 = inlined_call_operand.<no memory space> [shape: f32[1], index: 5, kind: input, shape index: {}]
  %s6 = inlined_call_operand.hbm [shape: f32[3,2048], index: 6, kind: input, shape index: {}]
  %s7 = inlined_call_operand.hbm [shape: f32[1,2048], index: 7, kind: output, shape index: {}]
  %s8 = sld [smem:[#allocation0]]
  $region62: #{tpu_custom_call.1} parent=0
    _
  %s10 = ssub.s32 1, %s8
  %s11 = scalar_select 0, %s10, %s8
  %12 = sst [smem:[#allocation2]] %s5
  $region1: #{tpu_custom_call.1} parent=0
    #allocation3 [shape = 'u8[2048]{0}', space=smem, size = 0x800, scoped, tag = 'input window, operand 0, single buffered']
    #allocation4 [shape = 's32[1]{0}', space=sflag, size = 0x4, scoped, tag = 'scoped memory for tpu_custom_call.1']
    #allocation5 [shape = 's32[1]{0}', space=sflag, size = 0x4, scoped, tag = 'scoped memory for tpu_custom_call.1']
    #allocation6 [shape = 's32[1]{0}', space=sflag, size = 0x4, scoped, tag = 'scoped memory for tpu_custom_call.1']
    #allocation7 [shape = 's32[1]{0}', space=sflag, size = 0x4, scoped, tag = 'scoped memory for tpu_custom_call.1']
    #allocation8 [shape = 'u8[512]{0}', space=smem, size = 0x200, scoped, tag = 'input window, operand 1, single buffered']
    #allocation9 [shape = 'u8[8192]{0}', space=smem, size = 0x2000, scoped, tag = 'input window, operand 2, single buffered']
    #allocation10 [shape = 's32[1]{0}', space=sflag, size = 0x4, scoped, tag = 'scoped memory for tpu_custom_call.1']
    #allocation11 [shape = 'u8[512]{0}', space=smem, size = 0x200, scoped, tag = 'input window, operand 3, single buffered']
    #allocation12 [shape = 's32[1]{0}', space=sflag, size = 0x4, scoped, tag = 'scoped memory for tpu_custom_call.1']
    #allocation13 [shape = 'u8[512]{0}', space=smem, size = 0x200, scoped, tag = 'input window, operand 4, single buffered']
    #allocation14 [shape = 'u8[32768]{0}', space=vmem, size = 0x8000, scoped, tag = 'input window, operand 6, single buffered']
    #allocation15 [shape = 'u8[8192]{0}', space=vmem, size = 0x2000, scoped, tag = 'output window, operand 0, single buffered']
    %13 = vsyncpa [#allocation6], 0
    %14 = vsyncpa [#allocation7], 0
    %15 = vsyncpa [#allocation10], 0
    %16 = vsyncpa [#allocation12], 0
    %17 = vsyncpa [#allocation4], 0
    %18 = vsyncpa [#allocation5], 0
    // Predicated region
    $region2: #{tpu_custom_call.1} parent=1 // pred_check
      _
    $region3: #{tpu_custom_call.1} parent=1 // pred_check_branch
      %20 = sbr.rel (0) target = $region5
    $region4: #{tpu_custom_call.1} parent=1 // pred_region
      %s22 = ssub.s32 64, 64
      %23 = vsyncadd [#allocation6], %s22
      %26 = dma.hbm_to_smem %s0, 64, [#allocation3], [#allocation6]
    $region5: #{tpu_custom_call.1} parent=1 // pred_fallthru
      _
    // Predicated region
    $region6: #{tpu_custom_call.1} parent=1 // pred_check
      _
    $region7: #{tpu_custom_call.1} parent=1 // pred_check_branch
      %28 = sbr.rel (0) target = $region9
    $region8: #{tpu_custom_call.1} parent=1 // pred_region
      %s30 = ssub.s32 16, 16
      %31 = vsyncadd [#allocation7], %s30
      %s33 = sshll.u32 %s1, 4
      %s34 = int_to_ptr.vmem [resolvable:$true] %s33
      %36 = dma.vmem_to_smem %s34, 16, [#allocation8], [#allocation7]
    $region9: #{tpu_custom_call.1} parent=1 // pred_fallthru
      _
    // Predicated region
    $region10: #{tpu_custom_call.1} parent=1 // pred_check
      _
    $region11: #{tpu_custom_call.1} parent=1 // pred_check_branch
      %38 = sbr.rel (0) target = $region13
    $region12: #{tpu_custom_call.1} parent=1 // pred_region
      %s40 = ssub.s32 256, 256
      %41 = vsyncadd [#allocation10], %s40
      %46 = dma.hbm_to_smem %s2, 256, [#allocation9], [#allocation10], 128, 128, 8
    $region13: #{tpu_custom_call.1} parent=1 // pred_fallthru
      _
    // Predicated region
    $region14: #{tpu_custom_call.1} parent=1 // pred_check
      _
    $region15: #{tpu_custom_call.1} parent=1 // pred_check_branch
      %48 = sbr.rel (0) target = $region17
    $region16: #{tpu_custom_call.1} parent=1 // pred_region
      %s50 = ssub.s32 16, 16
      %51 = vsyncadd [#allocation12], %s50
      %s53 = sshll.u32 %s3, 4
      %s54 = int_to_ptr.vmem [resolvable:$true] %s53
      %56 = dma.vmem_to_smem %s54, 16, [#allocation11], [#allocation12]
    $region17: #{tpu_custom_call.1} parent=1 // pred_fallthru
      _
    // Predicated region
    $region18: #{tpu_custom_call.1} parent=1 // pred_check
      _
    $region19: #{tpu_custom_call.1} parent=1 // pred_check_branch
      %58 = sbr.rel (0) target = $region21
    $region20: #{tpu_custom_call.1} parent=1 // pred_region
      %s60 = ssub.s32 16, 16
      %61 = vsyncadd [#allocation12], %s60
      %s63 = sshll.u32 %s4, 4
      %s64 = int_to_ptr.vmem [resolvable:$true] %s63
      %66 = dma.vmem_to_smem %s64, 16, [#allocation13], [#allocation12]
    $region21: #{tpu_custom_call.1} parent=1 // pred_fallthru
      _
    // Predicated region
    $region22: #{tpu_custom_call.1} parent=1 // pred_check
      _
    $region23: #{tpu_custom_call.1} parent=1 // pred_check_branch
      %68 = sbr.rel (0) target = $region25
    $region24: #{tpu_custom_call.1} parent=1 // pred_region
      _
    $region25: #{tpu_custom_call.1} parent=1 // pred_fallthru
      _
    // Predicated region
    $region26: #{tpu_custom_call.1} parent=1 // pred_check
      _
    $region27: #{tpu_custom_call.1} parent=1 // pred_check_branch
      %70 = sbr.rel (0) target = $region29
    $region28: #{tpu_custom_call.1} parent=1 // pred_region
      %s72 = ssub.s32 1024, 1024
      %73 = vsyncadd [#allocation4], %s72
      %s75 = sshll.u32 [#allocation14], 4
      %s76 = int_to_ptr.vmem [resolvable:$true] %s75
      %78 = dma.hbm_to_vmem [thread:$0]  %s6, 1024, %s76, [#allocation4]
    $region29: #{tpu_custom_call.1} parent=1 // pred_fallthru
      _
    // Predicated region
    $region30: #{tpu_custom_call.1} parent=1 // pred_check
      _
    $region31: #{tpu_custom_call.1} parent=1 // pred_check_branch
      %80 = sbr.rel (0) target = $region33
    $region32: #{tpu_custom_call.1} parent=1 // pred_region
      %81 = dma.done [#allocation6], 64
    $region33: #{tpu_custom_call.1} parent=1 // pred_fallthru
      _
    // Predicated region
    $region34: #{tpu_custom_call.1} parent=1 // pred_check
      _
    $region35: #{tpu_custom_call.1} parent=1 // pred_check_branch
      %83 = sbr.rel (0) target = $region37
    $region36: #{tpu_custom_call.1} parent=1 // pred_region
      %84 = dma.done [#allocation7], 16
    $region37: #{tpu_custom_call.1} parent=1 // pred_fallthru
      _
    // Predicated region
    $region38: #{tpu_custom_call.1} parent=1 // pred_check
      _
    $region39: #{tpu_custom_call.1} parent=1 // pred_check_branch
      %86 = sbr.rel (0) target = $region41
    $region40: #{tpu_custom_call.1} parent=1 // pred_region
      %87 = dma.done [#allocation10], 256
    $region41: #{tpu_custom_call.1} parent=1 // pred_fallthru
      _
    // Predicated region
    $region42: #{tpu_custom_call.1} parent=1 // pred_check
      _
    $region43: #{tpu_custom_call.1} parent=1 // pred_check_branch
      %89 = sbr.rel (0) target = $region45
    $region44: #{tpu_custom_call.1} parent=1 // pred_region
      %90 = dma.done [#allocation12], 16
    $region45: #{tpu_custom_call.1} parent=1 // pred_fallthru
      _
    // Predicated region
    $region46: #{tpu_custom_call.1} parent=1 // pred_check
      _
    $region47: #{tpu_custom_call.1} parent=1 // pred_check_branch
      %92 = sbr.rel (0) target = $region49
    $region48: #{tpu_custom_call.1} parent=1 // pred_region
      %93 = dma.done [#allocation12], 16
    $region49: #{tpu_custom_call.1} parent=1 // pred_fallthru
      _
    // Predicated region
    $region50: #{tpu_custom_call.1} parent=1 // pred_check
      _
    $region51: #{tpu_custom_call.1} parent=1 // pred_check_branch
      %95 = sbr.rel (0) target = $region53
    $region52: #{tpu_custom_call.1} parent=1 // pred_region
      %96 = dma.done [#allocation4], 1024
    $region53: #{tpu_custom_call.1} parent=1 // pred_fallthru
      _
    %97 = sfence
    %v98 = vld [vmem:[#allocation14] ss:$4 sm:$0xff]
    %s99 = scalar_lea.vmem [#allocation14], 32
    %v100 = vld [vmem:[%s99] ss:$4 sm:$0xff]
    %s101 = scalar_lea.vmem [#allocation14], 1
    %v102 = vld [vmem:[%s101] ss:$4 sm:$0xff]
    %s103 = scalar_lea.vmem [#allocation14], 33
    %v104 = vld [vmem:[%s103] ss:$4 sm:$0xff]
    %s105 = scalar_lea.vmem [#allocation14], 2
    %v106 = vld [vmem:[%s105] ss:$4 sm:$0xff]
    %s107 = scalar_lea.vmem [#allocation14], 34
    %v108 = vld [vmem:[%s107] ss:$4 sm:$0xff]
    %s109 = sld [smem:[#allocation3]]
    %v110 = vstv %s109
    %v111 = vmul.f32 %v98, %v110
    %v112 = vmul.f32 %v100, %v110
    %s113 = sld [smem:[#allocation8]]
    %v114 = vstv %s113
    %v115 = vadd.f32 %v111, %v114
    %v116 = vadd.f32 %v112, %v114
    %s117 = sld [smem:[#allocation3 + $0x80]]
    %v118 = vstv %s117
    %v119 = vmul.f32 %v102, %v118
    %v120 = vmul.f32 %v104, %v118
    %v121 = vadd.f32 %v115, %v119
    %v122 = vadd.f32 %v116, %v120
    %s123 = sld [smem:[#allocation3 + $0x100]]
    %v124 = vstv %s123
    %v125 = vmul.f32 %v106, %v124
    %v126 = vmul.f32 %v108, %v124
    %v127 = vadd.f32 %v121, %v125
    %v128 = vadd.f32 %v122, %v126
    %v129 = vmax.f32 %v127, 0.0
    %v130 = vmax.f32 %v128, 0.0
    %s131 = sld [smem:[#allocation3 + $0x1]]
    %v132 = vstv %s131
    %v133 = vmul.f32 %v98, %v132
    %v134 = vmul.f32 %v100, %v132
    %s135 = sld [smem:[#allocation8 + $0x1]]
    %v136 = vstv %s135
    %v137 = vadd.f32 %v133, %v136
    %v138 = vadd.f32 %v134, %v136
    %s139 = sld [smem:[#allocation3 + $0x81]]
    %v140 = vstv %s139
    %v141 = vmul.f32 %v102, %v140
    %v142 = vmul.f32 %v104, %v140
    %v143 = vadd.f32 %v137, %v141
    %v144 = vadd.f32 %v138, %v142
    %s145 = sld [smem:[#allocation3 + $0x101]]
    %v146 = vstv %s145
    %v147 = vmul.f32 %v106, %v146
    %v148 = vmul.f32 %v108, %v146
    %v149 = vadd.f32 %v143, %v147
    %v150 = vadd.f32 %v144, %v148
    %v151 = vmax.f32 %v149, 0.0
    %v152 = vmax.f32 %v150, 0.0
    %s153 = sld [smem:[#allocation3 + $0x2]]
    %v154 = vstv %s153
    %v155 = vmul.f32 %v98, %v154
    %v156 = vmul.f32 %v100, %v154
    %s157 = sld [smem:[#allocation8 + $0x2]]
    %v158 = vstv %s157
    %v159 = vadd.f32 %v155, %v158
    %v160 = vadd.f32 %v156, %v158
    %s161 = sld [smem:[#allocation3 + $0x82]]
    %v162 = vstv %s161
    %v163 = vmul.f32 %v102, %v162
    %v164 = vmul.f32 %v104, %v162
    %v165 = vadd.f32 %v159, %v163
    %v166 = vadd.f32 %v160, %v164
    %s167 = sld [smem:[#allocation3 + $0x102]]
    %v168 = vstv %s167
    %v169 = vmul.f32 %v106, %v168
    %v170 = vmul.f32 %v108, %v168
    %v171 = vadd.f32 %v165, %v169
    %v172 = vadd.f32 %v166, %v170
    %v173 = vmax.f32 %v171, 0.0
    %v174 = vmax.f32 %v172, 0.0
    %s175 = sld [smem:[#allocation3 + $0x3]]
    %v176 = vstv %s175
    %v177 = vmul.f32 %v98, %v176
    %v178 = vmul.f32 %v100, %v176
    %s179 = sld [smem:[#allocation8 + $0x3]]
    %v180 = vstv %s179
    %v181 = vadd.f32 %v177, %v180
    %v182 = vadd.f32 %v178, %v180
    %s183 = sld [smem:[#allocation3 + $0x83]]
    %v184 = vstv %s183
    %v185 = vmul.f32 %v102, %v184
    %v186 = vmul.f32 %v104, %v184
    %v187 = vadd.f32 %v181, %v185
    %v188 = vadd.f32 %v182, %v186
    %s189 = sld [smem:[#allocation3 + $0x103]]
    %v190 = vstv %s189
    %v191 = vmul.f32 %v106, %v190
    %v192 = vmul.f32 %v108, %v190
    %v193 = vadd.f32 %v187, %v191
    %v194 = vadd.f32 %v188, %v192
    %v195 = vmax.f32 %v193, 0.0
    %v196 = vmax.f32 %v194, 0.0
    %s197 = sld [smem:[#allocation3 + $0x4]]
    %v198 = vstv %s197
    %v199 = vmul.f32 %v98, %v198
    %v200 = vmul.f32 %v100, %v198
    %s201 = sld [smem:[#allocation8 + $0x4]]
    %v202 = vstv %s201
    %v203 = vadd.f32 %v199, %v202
    %v204 = vadd.f32 %v200, %v202
    %s205 = sld [smem:[#allocation3 + $0x84]]
    %v206 = vstv %s205
    %v207 = vmul.f32 %v102, %v206
    %v208 = vmul.f32 %v104, %v206
    %v209 = vadd.f32 %v203, %v207
    %v210 = vadd.f32 %v204, %v208
    %s211 = sld [smem:[#allocation3 + $0x104]]
    %v212 = vstv %s211
    %v213 = vmul.f32 %v106, %v212
    %v214 = vmul.f32 %v108, %v212
    %v215 = vadd.f32 %v209, %v213
    %v216 = vadd.f32 %v210, %v214
    %v217 = vmax.f32 %v215, 0.0
    %v218 = vmax.f32 %v216, 0.0
    %s219 = sld [smem:[#allocation3 + $0x5]]
    %v220 = vstv %s219
    %v221 = vmul.f32 %v98, %v220
    %v222 = vmul.f32 %v100, %v220
    %s223 = sld [smem:[#allocation8 + $0x5]]
    %v224 = vstv %s223
    %v225 = vadd.f32 %v221, %v224
    %v226 = vadd.f32 %v222, %v224
    %s227 = sld [smem:[#allocation3 + $0x85]]
    %v228 = vstv %s227
    %v229 = vmul.f32 %v102, %v228
    %v230 = vmul.f32 %v104, %v228
    %v231 = vadd.f32 %v225, %v229
    %v232 = vadd.f32 %v226, %v230
    %s233 = sld [smem:[#allocation3 + $0x105]]
    %v234 = vstv %s233
    %v235 = vmul.f32 %v106, %v234
    %v236 = vmul.f32 %v108, %v234
    %v237 = vadd.f32 %v231, %v235
    %v238 = vadd.f32 %v232, %v236
    %v239 = vmax.f32 %v237, 0.0
    %v240 = vmax.f32 %v238, 0.0
    %s241 = sld [smem:[#allocation3 + $0x6]]
    %v242 = vstv %s241
    %v243 = vmul.f32 %v98, %v242
    %v244 = vmul.f32 %v100, %v242
    %s245 = sld [smem:[#allocation8 + $0x6]]
    %v246 = vstv %s245
    %v247 = vadd.f32 %v243, %v246
    %v248 = vadd.f32 %v244, %v246
    %s249 = sld [smem:[#allocation3 + $0x86]]
    %v250 = vstv %s249
    %v251 = vmul.f32 %v102, %v250
    %v252 = vmul.f32 %v104, %v250
    %v253 = vadd.f32 %v247, %v251
    %v254 = vadd.f32 %v248, %v252
    %s255 = sld [smem:[#allocation3 + $0x106]]
    %v256 = vstv %s255
    %v257 = vmul.f32 %v106, %v256
    %v258 = vmul.f32 %v108, %v256
    %v259 = vadd.f32 %v253, %v257
    %v260 = vadd.f32 %v254, %v258
    %v261 = vmax.f32 %v259, 0.0
    %v262 = vmax.f32 %v260, 0.0
    %s263 = sld [smem:[#allocation3 + $0x7]]
    %v264 = vstv %s263
    %v265 = vmul.f32 %v98, %v264
    %v266 = vmul.f32 %v100, %v264
    %s267 = sld [smem:[#allocation8 + $0x7]]
    %v268 = vstv %s267
    %v269 = vadd.f32 %v265, %v268
    %v270 = vadd.f32 %v266, %v268
    %s271 = sld [smem:[#allocation3 + $0x87]]
    %v272 = vstv %s271
    %v273 = vmul.f32 %v102, %v272
    %v274 = vmul.f32 %v104, %v272
    %v275 = vadd.f32 %v269, %v273
    %v276 = vadd.f32 %v270, %v274
    %s277 = sld [smem:[#allocation3 + $0x107]]
    %v278 = vstv %s277
    %v279 = vmul.f32 %v106, %v278
    %v280 = vmul.f32 %v108, %v278
    %v281 = vadd.f32 %v275, %v279
    %v282 = vadd.f32 %v276, %v280
    %v283 = vmax.f32 %v281, 0.0
    %v284 = vmax.f32 %v282, 0.0
    %s285 = sld [smem:[#allocation3 + $0x8]]
    %v286 = vstv %s285
    %v287 = vmul.f32 %v98, %v286
    %v288 = vmul.f32 %v100, %v286
    %s289 = sld [smem:[#allocation8 + $0x8]]
    %v290 = vstv %s289
    %v291 = vadd.f32 %v287, %v290
    %v292 = vadd.f32 %v288, %v290
    %s293 = sld [smem:[#allocation3 + $0x88]]
    %v294 = vstv %s293
    %v295 = vmul.f32 %v102, %v294
    %v296 = vmul.f32 %v104, %v294
    %v297 = vadd.f32 %v291, %v295
    %v298 = vadd.f32 %v292, %v296
    %s299 = sld [smem:[#allocation3 + $0x108]]
    %v300 = vstv %s299
    %v301 = vmul.f32 %v106, %v300
    %v302 = vmul.f32 %v108, %v300
    %v303 = vadd.f32 %v297, %v301
    %v304 = vadd.f32 %v298, %v302
    %v305 = vmax.f32 %v303, 0.0
    %v306 = vmax.f32 %v304, 0.0
    %s307 = sld [smem:[#allocation3 + $0x9]]
    %v308 = vstv %s307
    %v309 = vmul.f32 %v98, %v308
    %v310 = vmul.f32 %v100, %v308
    %s311 = sld [smem:[#allocation8 + $0x9]]
    %v312 = vstv %s311
    %v313 = vadd.f32 %v309, %v312
    %v314 = vadd.f32 %v310, %v312
    %s315 = sld [smem:[#allocation3 + $0x89]]
    %v316 = vstv %s315
    %v317 = vmul.f32 %v102, %v316
    %v318 = vmul.f32 %v104, %v316
    %v319 = vadd.f32 %v313, %v317
    %v320 = vadd.f32 %v314, %v318
    %s321 = sld [smem:[#allocation3 + $0x109]]
    %v322 = vstv %s321
    %v323 = vmul.f32 %v106, %v322
    %v324 = vmul.f32 %v108, %v322
    %v325 = vadd.f32 %v319, %v323
    %v326 = vadd.f32 %v320, %v324
    %v327 = vmax.f32 %v325, 0.0
    %v328 = vmax.f32 %v326, 0.0
    %s329 = sld [smem:[#allocation9]]
    %v330 = vstv %s329
    %v331 = vmul.f32 %v129, %v330
    %v332 = vmul.f32 %v130, %v330
    %s333 = sld [smem:[#allocation11]]
    %v334 = vstv %s333
    %v335 = vadd.f32 %v331, %v334
    %v336 = vadd.f32 %v332, %v334
    %s337 = sld [smem:[#allocation9 + $0x80]]
    %v338 = vstv %s337
    %v339 = vmul.f32 %v151, %v338
    %v340 = vmul.f32 %v152, %v338
    %v341 = vadd.f32 %v335, %v339
    %v342 = vadd.f32 %v336, %v340
    %s343 = sld [smem:[#allocation9 + $0x100]]
    %v344 = vstv %s343
    %v345 = vmul.f32 %v173, %v344
    %v346 = vmul.f32 %v174, %v344
    %v347 = vadd.f32 %v341, %v345
    %v348 = vadd.f32 %v342, %v346
    %s349 = sld [smem:[#allocation9 + $0x180]]
    %v350 = vstv %s349
    %v351 = vmul.f32 %v195, %v350
    %v352 = vmul.f32 %v196, %v350
    %v353 = vadd.f32 %v347, %v351
    %v354 = vadd.f32 %v348, %v352
    %s355 = sld [smem:[#allocation9 + $0x200]]
    %v356 = vstv %s355
    %v357 = vmul.f32 %v217, %v356
    %v358 = vmul.f32 %v218, %v356
    %v359 = vadd.f32 %v353, %v357
    %v360 = vadd.f32 %v354, %v358
    %s361 = sld [smem:[#allocation9 + $0x280]]
    %v362 = vstv %s361
    %v363 = vmul.f32 %v239, %v362
    %v364 = vmul.f32 %v240, %v362
    %v365 = vadd.f32 %v359, %v363
    %v366 = vadd.f32 %v360, %v364
    %s367 = sld [smem:[#allocation9 + $0x300]]
    %v368 = vstv %s367
    %v369 = vmul.f32 %v261, %v368
    %v370 = vmul.f32 %v262, %v368
    %v371 = vadd.f32 %v365, %v369
    %v372 = vadd.f32 %v366, %v370
    %s373 = sld [smem:[#allocation9 + $0x380]]
    %v374 = vstv %s373
    %v375 = vmul.f32 %v283, %v374
    %v376 = vmul.f32 %v284, %v374
    %v377 = vadd.f32 %v371, %v375
    %v378 = vadd.f32 %v372, %v376
    %s379 = sld [smem:[#allocation9 + $0x400]]
    %v380 = vstv %s379
    %v381 = vmul.f32 %v305, %v380
    %v382 = vmul.f32 %v306, %v380
    %v383 = vadd.f32 %v377, %v381
    %v384 = vadd.f32 %v378, %v382
    %s385 = sld [smem:[#allocation9 + $0x480]]
    %v386 = vstv %s385
    %v387 = vmul.f32 %v327, %v386
    %v388 = vmul.f32 %v328, %v386
    %v389 = vadd.f32 %v383, %v387
    %v390 = vadd.f32 %v384, %v388
    %v391 = vmax.f32 %v389, 0.0
    %v392 = vmax.f32 %v390, 0.0
    %s393 = sld [smem:[#allocation9 + $0x1]]
    %v394 = vstv %s393
    %v395 = vmul.f32 %v129, %v394
    %v396 = vmul.f32 %v130, %v394
    %s397 = sld [smem:[#allocation11 + $0x1]]
    %v398 = vstv %s397
    %v399 = vadd.f32 %v395, %v398
    %v400 = vadd.f32 %v396, %v398
    %s401 = sld [smem:[#allocation9 + $0x81]]
    %v402 = vstv %s401
    %v403 = vmul.f32 %v151, %v402
    %v404 = vmul.f32 %v152, %v402
    %v405 = vadd.f32 %v399, %v403
    %v406 = vadd.f32 %v400, %v404
    %s407 = sld [smem:[#allocation9 + $0x101]]
    %v408 = vstv %s407
    %v409 = vmul.f32 %v173, %v408
    %v410 = vmul.f32 %v174, %v408
    %v411 = vadd.f32 %v405, %v409
    %v412 = vadd.f32 %v406, %v410
    %s413 = sld [smem:[#allocation9 + $0x181]]
    %v414 = vstv %s413
    %v415 = vmul.f32 %v195, %v414
    %v416 = vmul.f32 %v196, %v414
    %v417 = vadd.f32 %v411, %v415
    %v418 = vadd.f32 %v412, %v416
    %s419 = sld [smem:[#allocation9 + $0x201]]
    %v420 = vstv %s419
    %v421 = vmul.f32 %v217, %v420
    %v422 = vmul.f32 %v218, %v420
    %v423 = vadd.f32 %v417, %v421
    %v424 = vadd.f32 %v418, %v422
    %s425 = sld [smem:[#allocation9 + $0x281]]
    %v426 = vstv %s425
    %v427 = vmul.f32 %v239, %v426
    %v428 = vmul.f32 %v240, %v426
    %v429 = vadd.f32 %v423, %v427
    %v430 = vadd.f32 %v424, %v428
    %s431 = sld [smem:[#allocation9 + $0x301]]
    %v432 = vstv %s431
    %v433 = vmul.f32 %v261, %v432
    %v434 = vmul.f32 %v262, %v432
    %v435 = vadd.f32 %v429, %v433
    %v436 = vadd.f32 %v430, %v434
    %s437 = sld [smem:[#allocation9 + $0x381]]
    %v438 = vstv %s437
    %v439 = vmul.f32 %v283, %v438
    %v440 = vmul.f32 %v284, %v438
    %v441 = vadd.f32 %v435, %v439
    %v442 = vadd.f32 %v436, %v440
    %s443 = sld [smem:[#allocation9 + $0x401]]
    %v444 = vstv %s443
    %v445 = vmul.f32 %v305, %v444
    %v446 = vmul.f32 %v306, %v444
    %v447 = vadd.f32 %v441, %v445
    %v448 = vadd.f32 %v442, %v446
    %s449 = sld [smem:[#allocation9 + $0x481]]
    %v450 = vstv %s449
    %v451 = vmul.f32 %v327, %v450
    %v452 = vmul.f32 %v328, %v450
    %v453 = vadd.f32 %v447, %v451
    %v454 = vadd.f32 %v448, %v452
    %v455 = vmax.f32 %v453, 0.0
    %v456 = vmax.f32 %v454, 0.0
    %s457 = sld [smem:[#allocation9 + $0x2]]
    %v458 = vstv %s457
    %v459 = vmul.f32 %v129, %v458
    %v460 = vmul.f32 %v130, %v458
    %s461 = sld [smem:[#allocation11 + $0x2]]
    %v462 = vstv %s461
    %v463 = vadd.f32 %v459, %v462
    %v464 = vadd.f32 %v460, %v462
    %s465 = sld [smem:[#allocation9 + $0x82]]
    %v466 = vstv %s465
    %v467 = vmul.f32 %v151, %v466
    %v468 = vmul.f32 %v152, %v466
    %v469 = vadd.f32 %v463, %v467
    %v470 = vadd.f32 %v464, %v468
    %s471 = sld [smem:[#allocation9 + $0x102]]
    %v472 = vstv %s471
    %v473 = vmul.f32 %v173, %v472
    %v474 = vmul.f32 %v174, %v472
    %v475 = vadd.f32 %v469, %v473
    %v476 = vadd.f32 %v470, %v474
    %s477 = sld [smem:[#allocation9 + $0x182]]
    %v478 = vstv %s477
    %v479 = vmul.f32 %v195, %v478
    %v480 = vmul.f32 %v196, %v478
    %v481 = vadd.f32 %v475, %v479
    %v482 = vadd.f32 %v476, %v480
    %s483 = sld [smem:[#allocation9 + $0x202]]
    %v484 = vstv %s483
    %v485 = vmul.f32 %v217, %v484
    %v486 = vmul.f32 %v218, %v484
    %v487 = vadd.f32 %v481, %v485
    %v488 = vadd.f32 %v482, %v486
    %s489 = sld [smem:[#allocation9 + $0x282]]
    %v490 = vstv %s489
    %v491 = vmul.f32 %v239, %v490
    %v492 = vmul.f32 %v240, %v490
    %v493 = vadd.f32 %v487, %v491
    %v494 = vadd.f32 %v488, %v492
    %s495 = sld [smem:[#allocation9 + $0x302]]
    %v496 = vstv %s495
    %v497 = vmul.f32 %v261, %v496
    %v498 = vmul.f32 %v262, %v496
    %v499 = vadd.f32 %v493, %v497
    %v500 = vadd.f32 %v494, %v498
    %s501 = sld [smem:[#allocation9 + $0x382]]
    %v502 = vstv %s501
    %v503 = vmul.f32 %v283, %v502
    %v504 = vmul.f32 %v284, %v502
    %v505 = vadd.f32 %v499, %v503
    %v506 = vadd.f32 %v500, %v504
    %s507 = sld [smem:[#allocation9 + $0x402]]
    %v508 = vstv %s507
    %v509 = vmul.f32 %v305, %v508
    %v510 = vmul.f32 %v306, %v508
    %v511 = vadd.f32 %v505, %v509
    %v512 = vadd.f32 %v506, %v510
    %s513 = sld [smem:[#allocation9 + $0x482]]
    %v514 = vstv %s513
    %v515 = vmul.f32 %v327, %v514
    %v516 = vmul.f32 %v328, %v514
    %v517 = vadd.f32 %v511, %v515
    %v518 = vadd.f32 %v512, %v516
    %v519 = vmax.f32 %v517, 0.0
    %v520 = vmax.f32 %v518, 0.0
    %s521 = sld [smem:[#allocation9 + $0x3]]
    %v522 = vstv %s521
    %v523 = vmul.f32 %v129, %v522
    %v524 = vmul.f32 %v130, %v522
    %s525 = sld [smem:[#allocation11 + $0x3]]
    %v526 = vstv %s525
    %v527 = vadd.f32 %v523, %v526
    %v528 = vadd.f32 %v524, %v526
    %s529 = sld [smem:[#allocation9 + $0x83]]
    %v530 = vstv %s529
    %v531 = vmul.f32 %v151, %v530
    %v532 = vmul.f32 %v152, %v530
    %v533 = vadd.f32 %v527, %v531
    %v534 = vadd.f32 %v528, %v532
    %s535 = sld [smem:[#allocation9 + $0x103]]
    %v536 = vstv %s535
    %v537 = vmul.f32 %v173, %v536
    %v538 = vmul.f32 %v174, %v536
    %v539 = vadd.f32 %v533, %v537
    %v540 = vadd.f32 %v534, %v538
    %s541 = sld [smem:[#allocation9 + $0x183]]
    %v542 = vstv %s541
    %v543 = vmul.f32 %v195, %v542
    %v544 = vmul.f32 %v196, %v542
    %v545 = vadd.f32 %v539, %v543
    %v546 = vadd.f32 %v540, %v544
    %s547 = sld [smem:[#allocation9 + $0x203]]
    %v548 = vstv %s547
    %v549 = vmul.f32 %v217, %v548
    %v550 = vmul.f32 %v218, %v548
    %v551 = vadd.f32 %v545, %v549
    %v552 = vadd.f32 %v546, %v550
    %s553 = sld [smem:[#allocation9 + $0x283]]
    %v554 = vstv %s553
    %v555 = vmul.f32 %v239, %v554
    %v556 = vmul.f32 %v240, %v554
    %v557 = vadd.f32 %v551, %v555
    %v558 = vadd.f32 %v552, %v556
    %s559 = sld [smem:[#allocation9 + $0x303]]
    %v560 = vstv %s559
    %v561 = vmul.f32 %v261, %v560
    %v562 = vmul.f32 %v262, %v560
    %v563 = vadd.f32 %v557, %v561
    %v564 = vadd.f32 %v558, %v562
    %s565 = sld [smem:[#allocation9 + $0x383]]
    %v566 = vstv %s565
    %v567 = vmul.f32 %v283, %v566
    %v568 = vmul.f32 %v284, %v566
    %v569 = vadd.f32 %v563, %v567
    %v570 = vadd.f32 %v564, %v568
    %s571 = sld [smem:[#allocation9 + $0x403]]
    %v572 = vstv %s571
    %v573 = vmul.f32 %v305, %v572
    %v574 = vmul.f32 %v306, %v572
    %v575 = vadd.f32 %v569, %v573
    %v576 = vadd.f32 %v570, %v574
    %s577 = sld [smem:[#allocation9 + $0x483]]
    %v578 = vstv %s577
    %v579 = vmul.f32 %v327, %v578
    %v580 = vmul.f32 %v328, %v578
    %v581 = vadd.f32 %v575, %v579
    %v582 = vadd.f32 %v576, %v580
    %v583 = vmax.f32 %v581, 0.0
    %v584 = vmax.f32 %v582, 0.0
    %s585 = sld [smem:[#allocation9 + $0x4]]
    %v586 = vstv %s585
    %v587 = vmul.f32 %v129, %v586
    %v588 = vmul.f32 %v130, %v586
    %s589 = sld [smem:[#allocation11 + $0x4]]
    %v590 = vstv %s589
    %v591 = vadd.f32 %v587, %v590
    %v592 = vadd.f32 %v588, %v590
    %s593 = sld [smem:[#allocation9 + $0x84]]
    %v594 = vstv %s593
    %v595 = vmul.f32 %v151, %v594
    %v596 = vmul.f32 %v152, %v594
    %v597 = vadd.f32 %v591, %v595
    %v598 = vadd.f32 %v592, %v596
    %s599 = sld [smem:[#allocation9 + $0x104]]
    %v600 = vstv %s599
    %v601 = vmul.f32 %v173, %v600
    %v602 = vmul.f32 %v174, %v600
    %v603 = vadd.f32 %v597, %v601
    %v604 = vadd.f32 %v598, %v602
    %s605 = sld [smem:[#allocation9 + $0x184]]
    %v606 = vstv %s605
    %v607 = vmul.f32 %v195, %v606
    %v608 = vmul.f32 %v196, %v606
    %v609 = vadd.f32 %v603, %v607
    %v610 = vadd.f32 %v604, %v608
    %s611 = sld [smem:[#allocation9 + $0x204]]
    %v612 = vstv %s611
    %v613 = vmul.f32 %v217, %v612
    %v614 = vmul.f32 %v218, %v612
    %v615 = vadd.f32 %v609, %v613
    %v616 = vadd.f32 %v610, %v614
    %s617 = sld [smem:[#allocation9 + $0x284]]
    %v618 = vstv %s617
    %v619 = vmul.f32 %v239, %v618
    %v620 = vmul.f32 %v240, %v618
    %v621 = vadd.f32 %v615, %v619
    %v622 = vadd.f32 %v616, %v620
    %s623 = sld [smem:[#allocation9 + $0x304]]
    %v624 = vstv %s623
    %v625 = vmul.f32 %v261, %v624
    %v626 = vmul.f32 %v262, %v624
    %v627 = vadd.f32 %v621, %v625
    %v628 = vadd.f32 %v622, %v626
    %s629 = sld [smem:[#allocation9 + $0x384]]
    %v630 = vstv %s629
    %v631 = vmul.f32 %v283, %v630
    %v632 = vmul.f32 %v284, %v630
    %v633 = vadd.f32 %v627, %v631
    %v634 = vadd.f32 %v628, %v632
    %s635 = sld [smem:[#allocation9 + $0x404]]
    %v636 = vstv %s635
    %v637 = vmul.f32 %v305, %v636
    %v638 = vmul.f32 %v306, %v636
    %v639 = vadd.f32 %v633, %v637
    %v640 = vadd.f32 %v634, %v638
    %s641 = sld [smem:[#allocation9 + $0x484]]
    %v642 = vstv %s641
    %v643 = vmul.f32 %v327, %v642
    %v644 = vmul.f32 %v328, %v642
    %v645 = vadd.f32 %v639, %v643
    %v646 = vadd.f32 %v640, %v644
    %v647 = vmax.f32 %v645, 0.0
    %v648 = vmax.f32 %v646, 0.0
    %s649 = sld [smem:[#allocation9 + $0x5]]
    %v650 = vstv %s649
    %v651 = vmul.f32 %v129, %v650
    %v652 = vmul.f32 %v130, %v650
    %s653 = sld [smem:[#allocation11 + $0x5]]
    %v654 = vstv %s653
    %v655 = vadd.f32 %v651, %v654
    %v656 = vadd.f32 %v652, %v654
    %s657 = sld [smem:[#allocation9 + $0x85]]
    %v658 = vstv %s657
    %v659 = vmul.f32 %v151, %v658
    %v660 = vmul.f32 %v152, %v658
    %v661 = vadd.f32 %v655, %v659
    %v662 = vadd.f32 %v656, %v660
    %s663 = sld [smem:[#allocation9 + $0x105]]
    %v664 = vstv %s663
    %v665 = vmul.f32 %v173, %v664
    %v666 = vmul.f32 %v174, %v664
    %v667 = vadd.f32 %v661, %v665
    %v668 = vadd.f32 %v662, %v666
    %s669 = sld [smem:[#allocation9 + $0x185]]
    %v670 = vstv %s669
    %v671 = vmul.f32 %v195, %v670
    %v672 = vmul.f32 %v196, %v670
    %v673 = vadd.f32 %v667, %v671
    %v674 = vadd.f32 %v668, %v672
    %s675 = sld [smem:[#allocation9 + $0x205]]
    %v676 = vstv %s675
    %v677 = vmul.f32 %v217, %v676
    %v678 = vmul.f32 %v218, %v676
    %v679 = vadd.f32 %v673, %v677
    %v680 = vadd.f32 %v674, %v678
    %s681 = sld [smem:[#allocation9 + $0x285]]
    %v682 = vstv %s681
    %v683 = vmul.f32 %v239, %v682
    %v684 = vmul.f32 %v240, %v682
    %v685 = vadd.f32 %v679, %v683
    %v686 = vadd.f32 %v680, %v684
    %s687 = sld [smem:[#allocation9 + $0x305]]
    %v688 = vstv %s687
    %v689 = vmul.f32 %v261, %v688
    %v690 = vmul.f32 %v262, %v688
    %v691 = vadd.f32 %v685, %v689
    %v692 = vadd.f32 %v686, %v690
    %s693 = sld [smem:[#allocation9 + $0x385]]
    %v694 = vstv %s693
    %v695 = vmul.f32 %v283, %v694
    %v696 = vmul.f32 %v284, %v694
    %v697 = vadd.f32 %v691, %v695
    %v698 = vadd.f32 %v692, %v696
    %s699 = sld [smem:[#allocation9 + $0x405]]
    %v700 = vstv %s699
    %v701 = vmul.f32 %v305, %v700
    %v702 = vmul.f32 %v306, %v700
    %v703 = vadd.f32 %v697, %v701
    %v704 = vadd.f32 %v698, %v702
    %s705 = sld [smem:[#allocation9 + $0x485]]
    %v706 = vstv %s705
    %v707 = vmul.f32 %v327, %v706
    %v708 = vmul.f32 %v328, %v706
    %v709 = vadd.f32 %v703, %v707
    %v710 = vadd.f32 %v704, %v708
    %v711 = vmax.f32 %v709, 0.0
    %v712 = vmax.f32 %v710, 0.0
    %s713 = sld [smem:[#allocation9 + $0x6]]
    %v714 = vstv %s713
    %v715 = vmul.f32 %v129, %v714
    %v716 = vmul.f32 %v130, %v714
    %s717 = sld [smem:[#allocation11 + $0x6]]
    %v718 = vstv %s717
    %v719 = vadd.f32 %v715, %v718
    %v720 = vadd.f32 %v716, %v718
    %s721 = sld [smem:[#allocation9 + $0x86]]
    %v722 = vstv %s721
    %v723 = vmul.f32 %v151, %v722
    %v724 = vmul.f32 %v152, %v722
    %v725 = vadd.f32 %v719, %v723
    %v726 = vadd.f32 %v720, %v724
    %s727 = sld [smem:[#allocation9 + $0x106]]
    %v728 = vstv %s727
    %v729 = vmul.f32 %v173, %v728
    %v730 = vmul.f32 %v174, %v728
    %v731 = vadd.f32 %v725, %v729
    %v732 = vadd.f32 %v726, %v730
    %s733 = sld [smem:[#allocation9 + $0x186]]
    %v734 = vstv %s733
    %v735 = vmul.f32 %v195, %v734
    %v736 = vmul.f32 %v196, %v734
    %v737 = vadd.f32 %v731, %v735
    %v738 = vadd.f32 %v732, %v736
    %s739 = sld [smem:[#allocation9 + $0x206]]
    %v740 = vstv %s739
    %v741 = vmul.f32 %v217, %v740
    %v742 = vmul.f32 %v218, %v740
    %v743 = vadd.f32 %v737, %v741
    %v744 = vadd.f32 %v738, %v742
    %s745 = sld [smem:[#allocation9 + $0x286]]
    %v746 = vstv %s745
    %v747 = vmul.f32 %v239, %v746
    %v748 = vmul.f32 %v240, %v746
    %v749 = vadd.f32 %v743, %v747
    %v750 = vadd.f32 %v744, %v748
    %s751 = sld [smem:[#allocation9 + $0x306]]
    %v752 = vstv %s751
    %v753 = vmul.f32 %v261, %v752
    %v754 = vmul.f32 %v262, %v752
    %v755 = vadd.f32 %v749, %v753
    %v756 = vadd.f32 %v750, %v754
    %s757 = sld [smem:[#allocation9 + $0x386]]
    %v758 = vstv %s757
    %v759 = vmul.f32 %v283, %v758
    %v760 = vmul.f32 %v284, %v758
    %v761 = vadd.f32 %v755, %v759
    %v762 = vadd.f32 %v756, %v760
    %s763 = sld [smem:[#allocation9 + $0x406]]
    %v764 = vstv %s763
    %v765 = vmul.f32 %v305, %v764
    %v766 = vmul.f32 %v306, %v764
    %v767 = vadd.f32 %v761, %v765
    %v768 = vadd.f32 %v762, %v766
    %s769 = sld [smem:[#allocation9 + $0x486]]
    %v770 = vstv %s769
    %v771 = vmul.f32 %v327, %v770
    %v772 = vmul.f32 %v328, %v770
    %v773 = vadd.f32 %v767, %v771
    %v774 = vadd.f32 %v768, %v772
    %v775 = vmax.f32 %v773, 0.0
    %v776 = vmax.f32 %v774, 0.0
    %s777 = sld [smem:[#allocation9 + $0x7]]
    %v778 = vstv %s777
    %v779 = vmul.f32 %v129, %v778
    %v780 = vmul.f32 %v130, %v778
    %s781 = sld [smem:[#allocation11 + $0x7]]
    %v782 = vstv %s781
    %v783 = vadd.f32 %v779, %v782
    %v784 = vadd.f32 %v780, %v782
    %s785 = sld [smem:[#allocation9 + $0x87]]
    %v786 = vstv %s785
    %v787 = vmul.f32 %v151, %v786
    %v788 = vmul.f32 %v152, %v786
    %v789 = vadd.f32 %v783, %v787
    %v790 = vadd.f32 %v784, %v788
    %s791 = sld [smem:[#allocation9 + $0x107]]
    %v792 = vstv %s791
    %v793 = vmul.f32 %v173, %v792
    %v794 = vmul.f32 %v174, %v792
    %v795 = vadd.f32 %v789, %v793
    %v796 = vadd.f32 %v790, %v794
    %s797 = sld [smem:[#allocation9 + $0x187]]
    %v798 = vstv %s797
    %v799 = vmul.f32 %v195, %v798
    %v800 = vmul.f32 %v196, %v798
    %v801 = vadd.f32 %v795, %v799
    %v802 = vadd.f32 %v796, %v800
    %s803 = sld [smem:[#allocation9 + $0x207]]
    %v804 = vstv %s803
    %v805 = vmul.f32 %v217, %v804
    %v806 = vmul.f32 %v218, %v804
    %v807 = vadd.f32 %v801, %v805
    %v808 = vadd.f32 %v802, %v806
    %s809 = sld [smem:[#allocation9 + $0x287]]
    %v810 = vstv %s809
    %v811 = vmul.f32 %v239, %v810
    %v812 = vmul.f32 %v240, %v810
    %v813 = vadd.f32 %v807, %v811
    %v814 = vadd.f32 %v808, %v812
    %s815 = sld [smem:[#allocation9 + $0x307]]
    %v816 = vstv %s815
    %v817 = vmul.f32 %v261, %v816
    %v818 = vmul.f32 %v262, %v816
    %v819 = vadd.f32 %v813, %v817
    %v820 = vadd.f32 %v814, %v818
    %s821 = sld [smem:[#allocation9 + $0x387]]
    %v822 = vstv %s821
    %v823 = vmul.f32 %v283, %v822
    %v824 = vmul.f32 %v284, %v822
    %v825 = vadd.f32 %v819, %v823
    %v826 = vadd.f32 %v820, %v824
    %s827 = sld [smem:[#allocation9 + $0x407]]
    %v828 = vstv %s827
    %v829 = vmul.f32 %v305, %v828
    %v830 = vmul.f32 %v306, %v828
    %v831 = vadd.f32 %v825, %v829
    %v832 = vadd.f32 %v826, %v830
    %s833 = sld [smem:[#allocation9 + $0x487]]
    %v834 = vstv %s833
    %v835 = vmul.f32 %v327, %v834
    %v836 = vmul.f32 %v328, %v834
    %v837 = vadd.f32 %v831, %v835
    %v838 = vadd.f32 %v832, %v836
    %v839 = vmax.f32 %v837, 0.0
    %v840 = vmax.f32 %v838, 0.0
    %s841 = sld [smem:[#allocation9 + $0x8]]
    %v842 = vstv %s841
    %v843 = vmul.f32 %v129, %v842
    %v844 = vmul.f32 %v130, %v842
    %s845 = sld [smem:[#allocation11 + $0x8]]
    %v846 = vstv %s845
    %v847 = vadd.f32 %v843, %v846
    %v848 = vadd.f32 %v844, %v846
    %s849 = sld [smem:[#allocation9 + $0x88]]
    %v850 = vstv %s849
    %v851 = vmul.f32 %v151, %v850
    %v852 = vmul.f32 %v152, %v850
    %v853 = vadd.f32 %v847, %v851
    %v854 = vadd.f32 %v848, %v852
    %s855 = sld [smem:[#allocation9 + $0x108]]
    %v856 = vstv %s855
    %v857 = vmul.f32 %v173, %v856
    %v858 = vmul.f32 %v174, %v856
    %v859 = vadd.f32 %v853, %v857
    %v860 = vadd.f32 %v854, %v858
    %s861 = sld [smem:[#allocation9 + $0x188]]
    %v862 = vstv %s861
    %v863 = vmul.f32 %v195, %v862
    %v864 = vmul.f32 %v196, %v862
    %v865 = vadd.f32 %v859, %v863
    %v866 = vadd.f32 %v860, %v864
    %s867 = sld [smem:[#allocation9 + $0x208]]
    %v868 = vstv %s867
    %v869 = vmul.f32 %v217, %v868
    %v870 = vmul.f32 %v218, %v868
    %v871 = vadd.f32 %v865, %v869
    %v872 = vadd.f32 %v866, %v870
    %s873 = sld [smem:[#allocation9 + $0x288]]
    %v874 = vstv %s873
    %v875 = vmul.f32 %v239, %v874
    %v876 = vmul.f32 %v240, %v874
    %v877 = vadd.f32 %v871, %v875
    %v878 = vadd.f32 %v872, %v876
    %s879 = sld [smem:[#allocation9 + $0x308]]
    %v880 = vstv %s879
    %v881 = vmul.f32 %v261, %v880
    %v882 = vmul.f32 %v262, %v880
    %v883 = vadd.f32 %v877, %v881
    %v884 = vadd.f32 %v878, %v882
    %s885 = sld [smem:[#allocation9 + $0x388]]
    %v886 = vstv %s885
    %v887 = vmul.f32 %v283, %v886
    %v888 = vmul.f32 %v284, %v886
    %v889 = vadd.f32 %v883, %v887
    %v890 = vadd.f32 %v884, %v888
    %s891 = sld [smem:[#allocation9 + $0x408]]
    %v892 = vstv %s891
    %v893 = vmul.f32 %v305, %v892
    %v894 = vmul.f32 %v306, %v892
    %v895 = vadd.f32 %v889, %v893
    %v896 = vadd.f32 %v890, %v894
    %s897 = sld [smem:[#allocation9 + $0x488]]
    %v898 = vstv %s897
    %v899 = vmul.f32 %v327, %v898
    %v900 = vmul.f32 %v328, %v898
    %v901 = vadd.f32 %v895, %v899
    %v902 = vadd.f32 %v896, %v900
    %v903 = vmax.f32 %v901, 0.0
    %v904 = vmax.f32 %v902, 0.0
    %s905 = sld [smem:[#allocation9 + $0x9]]
    %v906 = vstv %s905
    %v907 = vmul.f32 %v129, %v906
    %v908 = vmul.f32 %v130, %v906
    %s909 = sld [smem:[#allocation11 + $0x9]]
    %v910 = vstv %s909
    %v911 = vadd.f32 %v907, %v910
    %v912 = vadd.f32 %v908, %v910
    %s913 = sld [smem:[#allocation9 + $0x89]]
    %v914 = vstv %s913
    %v915 = vmul.f32 %v151, %v914
    %v916 = vmul.f32 %v152, %v914
    %v917 = vadd.f32 %v911, %v915
    %v918 = vadd.f32 %v912, %v916
    %s919 = sld [smem:[#allocation9 + $0x109]]
    %v920 = vstv %s919
    %v921 = vmul.f32 %v173, %v920
    %v922 = vmul.f32 %v174, %v920
    %v923 = vadd.f32 %v917, %v921
    %v924 = vadd.f32 %v918, %v922
    %s925 = sld [smem:[#allocation9 + $0x189]]
    %v926 = vstv %s925
    %v927 = vmul.f32 %v195, %v926
    %v928 = vmul.f32 %v196, %v926
    %v929 = vadd.f32 %v923, %v927
    %v930 = vadd.f32 %v924, %v928
    %s931 = sld [smem:[#allocation9 + $0x209]]
    %v932 = vstv %s931
    %v933 = vmul.f32 %v217, %v932
    %v934 = vmul.f32 %v218, %v932
    %v935 = vadd.f32 %v929, %v933
    %v936 = vadd.f32 %v930, %v934
    %s937 = sld [smem:[#allocation9 + $0x289]]
    %v938 = vstv %s937
    %v939 = vmul.f32 %v239, %v938
    %v940 = vmul.f32 %v240, %v938
    %v941 = vadd.f32 %v935, %v939
    %v942 = vadd.f32 %v936, %v940
    %s943 = sld [smem:[#allocation9 + $0x309]]
    %v944 = vstv %s943
    %v945 = vmul.f32 %v261, %v944
    %v946 = vmul.f32 %v262, %v944
    %v947 = vadd.f32 %v941, %v945
    %v948 = vadd.f32 %v942, %v946
    %s949 = sld [smem:[#allocation9 + $0x389]]
    %v950 = vstv %s949
    %v951 = vmul.f32 %v283, %v950
    %v952 = vmul.f32 %v284, %v950
    %v953 = vadd.f32 %v947, %v951
    %v954 = vadd.f32 %v948, %v952
    %s955 = sld [smem:[#allocation9 + $0x409]]
    %v956 = vstv %s955
    %v957 = vmul.f32 %v305, %v956
    %v958 = vmul.f32 %v306, %v956
    %v959 = vadd.f32 %v953, %v957
    %v960 = vadd.f32 %v954, %v958
    %s961 = sld [smem:[#allocation9 + $0x489]]
    %v962 = vstv %s961
    %v963 = vmul.f32 %v327, %v962
    %v964 = vmul.f32 %v328, %v962
    %v965 = vadd.f32 %v959, %v963
    %v966 = vadd.f32 %v960, %v964
    %v967 = vmax.f32 %v965, 0.0
    %v968 = vmax.f32 %v966, 0.0
    %s969 = sld [smem:[#allocation13]]
    %v970 = vstv %s969
    %v971 = vmul.f32 %v391, %v970
    %v972 = vmul.f32 %v392, %v970
    %s973 = sld [smem:[#allocation2]]
    %v974 = vstv %s973
    %v975 = vadd.f32 %v971, %v974
    %v976 = vadd.f32 %v972, %v974
    %s977 = sld [smem:[#allocation13 + $0x1]]
    %v978 = vstv %s977
    %v979 = vmul.f32 %v455, %v978
    %v980 = vmul.f32 %v456, %v978
    %v981 = vadd.f32 %v975, %v979
    %v982 = vadd.f32 %v976, %v980
    %s983 = sld [smem:[#allocation13 + $0x2]]
    %v984 = vstv %s983
    %v985 = vmul.f32 %v519, %v984
    %v986 = vmul.f32 %v520, %v984
    %v987 = vadd.f32 %v981, %v985
    %v988 = vadd.f32 %v982, %v986
    %s989 = sld [smem:[#allocation13 + $0x3]]
    %v990 = vstv %s989
    %v991 = vmul.f32 %v583, %v990
    %v992 = vmul.f32 %v584, %v990
    %v993 = vadd.f32 %v987, %v991
    %v994 = vadd.f32 %v988, %v992
    %s995 = sld [smem:[#allocation13 + $0x4]]
    %v996 = vstv %s995
    %v997 = vmul.f32 %v647, %v996
    %v998 = vmul.f32 %v648, %v996
    %v999 = vadd.f32 %v993, %v997
    %v1000 = vadd.f32 %v994, %v998
    %s1001 = sld [smem:[#allocation13 + $0x5]]
    %v1002 = vstv %s1001
    %v1003 = vmul.f32 %v711, %v1002
    %v1004 = vmul.f32 %v712, %v1002
    %v1005 = vadd.f32 %v999, %v1003
    %v1006 = vadd.f32 %v1000, %v1004
    %s1007 = sld [smem:[#allocation13 + $0x6]]
    %v1008 = vstv %s1007
    %v1009 = vmul.f32 %v775, %v1008
    %v1010 = vmul.f32 %v776, %v1008
    %v1011 = vadd.f32 %v1005, %v1009
    %v1012 = vadd.f32 %v1006, %v1010
    %s1013 = sld [smem:[#allocation13 + $0x7]]
    %v1014 = vstv %s1013
    %v1015 = vmul.f32 %v839, %v1014
    %v1016 = vmul.f32 %v840, %v1014
    %v1017 = vadd.f32 %v1011, %v1015
    %v1018 = vadd.f32 %v1012, %v1016
    %s1019 = sld [smem:[#allocation13 + $0x8]]
    %v1020 = vstv %s1019
    %v1021 = vmul.f32 %v903, %v1020
    %v1022 = vmul.f32 %v904, %v1020
    %v1023 = vadd.f32 %v1017, %v1021
    %v1024 = vadd.f32 %v1018, %v1022
    %s1025 = sld [smem:[#allocation13 + $0x9]]
    %v1026 = vstv %s1025
    %v1027 = vmul.f32 %v967, %v1026
    %v1028 = vmul.f32 %v968, %v1026
    %v1029 = vadd.f32 %v1023, %v1027
    %v1030 = vadd.f32 %v1024, %v1028
    %v1031 = vxor.u32 %v1029, 2147483648
    %v1032 = vxor.u32 %v1030, 2147483648
    %v1033 = vmul.f32 %v1031, 1.442695
    %v1034 = vpow.pop %v1033
    %v1035 = vmul.f32 %v1032, 1.442695
    %v1036 = vpow.pop %v1035
    %v1037 = vadd.f32 %v1034, 1.0
    %v1038 = vadd.f32 %v1036, 1.0
    %v1039 = vrcp.pop %v1037
    %v1040 = vmul.f32 1.0, %v1039
    %v1041 = vrcp.pop %v1038
    %v1042 = vmul.f32 1.0, %v1041
    %1043 = vst [vmem:[#allocation15] sm:$0xff] %v1040
    %1044 = vst [vmem:[#allocation15 + $0x8] sm:$0xff] %v1042
    // Predicated region
    $region54: #{tpu_custom_call.1} parent=1 // pred_check
      _
    $region55: #{tpu_custom_call.1} parent=1 // pred_check_branch
      %1046 = sbr.rel (0) target = $region57
    $region56: #{tpu_custom_call.1} parent=1 // pred_region
      %s1048 = ssub.s32 256, 256
      %1049 = vsyncadd [#allocation5], %s1048
      %s1051 = sshll.u32 [#allocation15], 4
      %s1052 = int_to_ptr.vmem [resolvable:$true] %s1051
      %1054 = dma.vmem_to_hbm [thread:$0]  %s1052, 256, %s7, [#allocation5]
    $region57: #{tpu_custom_call.1} parent=1 // pred_fallthru
      _
    // Predicated region
    $region58: #{tpu_custom_call.1} parent=1 // pred_check
      _
    $region59: #{tpu_custom_call.1} parent=1 // pred_check_branch
      %1056 = sbr.rel (0) target = $region61
    $region60: #{tpu_custom_call.1} parent=1 // pred_region
      %1057 = dma.done [#allocation5], 256
    $region61: #{tpu_custom_call.1} parent=1 // pred_fallthru
      _
    %1058 = vsyncpa [#allocation4], 1
    %1059 = vsyncpa [#allocation5], 1
    %1060 = vsyncpa [#allocation6], 1
    %1061 = vsyncpa [#allocation10], 1
    %1062 = vsyncpa [#allocation7], 1
    %1063 = vsyncpa [#allocation12], 1

</llo_original>
